<compile_context>
chip_gen: v7x
topology: tpu7x:2x2x1
jax: 0.10.0
libtpu: 0.0.40
codegen_flags: <defaults>
</compile_context>

<pallas_src>
import jax
import jax.numpy as jnp
from jax.experimental import pallas as pl
from jax.experimental.pallas import tpu as pltpu


K_IN = 28 * 28    # 784; fed unpadded, Mosaic lane-pads the contraction internally
HIDDEN = 512
N_OUT = 10
N_OUT_PAD = 128   # lane-dense output width (avoids masked vst on a 10-wide store)


def mlp_kernel(x_ref, w1_ref, b1_ref, w2_ref, b2_ref, w3_ref, b3_ref, o_ref):
    # x arrives f32 (halved wrapper traffic vs pre-padded bf16 copy); cast to
    # bf16 on the VPU right before the MXU op.
    x = x_ref[...].astype(jnp.bfloat16)
    # Layer 1: (tm, 784) bf16 @ (784, 512) bf16 -> f32, bias + ReLU in f32.
    h1 = jnp.dot(x, w1_ref[...], preferred_element_type=jnp.float32)
    h1 = jnp.maximum(h1 + b1_ref[...], 0.0)
    # Layer 2: bf16 operands, f32 accumulate.
    h2 = jnp.dot(h1.astype(jnp.bfloat16), w2_ref[...],
                 preferred_element_type=jnp.float32)
    h2 = jnp.maximum(h2 + b2_ref[...], 0.0)
    # Layer 3 (logits), lane-dense 128-wide output (cols 10..127 zero-weight).
    out = jnp.dot(h2.astype(jnp.bfloat16), w3_ref[...],
                  preferred_element_type=jnp.float32)
    o_ref[...] = (out + b3_ref[...]).astype(o_ref.dtype)


def _round_up(x, m):
    return ((x + m - 1) // m) * m


def _choose_tm(batch, cap=512):
    """Batch tile: multiple of 8 (sublane), sized to minimize batch padding,
    capped at `cap`, and forced to give >=2 grid steps when batch >= 16 so the
    "parallel" batch axis can be sharded across both v7x TensorCores."""
    if batch <= 8:
        return batch                              # single full-dim block
    b8 = _round_up(batch, 8)
    if b8 >= 16:
        cap = min(cap, max(8, (b8 // 2) // 8 * 8))  # >=2 steps (v7x megacore)
    n_tiles = -(-b8 // cap)
    return _round_up(-(-b8 // n_tiles), 8)          # smallest tm covering b8


def prepare_params(params):
    """One-time conversion to kernel layout (hoisted out of the per-call path):
    bf16 MXU weights, lane-dense padded last layer, f32 biases."""
    w1, b1, w2, b2, w3, b3 = params
    w1b = w1.astype(jnp.bfloat16)
    w2b = w2.astype(jnp.bfloat16)
    w3p = jnp.zeros((HIDDEN, N_OUT_PAD), jnp.bfloat16).at[:, :N_OUT].set(
        w3.astype(jnp.bfloat16))
    b1f = b1.astype(jnp.float32)
    b2f = b2.astype(jnp.float32)
    b3p = jnp.zeros((1, N_OUT_PAD), jnp.float32).at[:, :N_OUT].set(
        b3.astype(jnp.float32))
    return (w1b, b1f, w2b, b2f, w3p, b3p)


def mlp_forward(x_nchw, prepared, *, tm=None):
    """x_nchw: (B, 1, 28, 28) float32. `prepared` from prepare_params().
    Returns logits (B, 10) float32."""
    w1b, b1f, w2b, b2f, w3p, b3p = prepared
    B = x_nchw.shape[0]
    # Flatten: contiguous reshape only — no pad/cast copy of x in the wrapper.
    x2d = x_nchw.reshape(B, K_IN).astype(jnp.float32)

    if tm is None:
        tm = _choose_tm(B)
    grid = (pl.cdiv(B, tm),)

    rows = grid[0] * tm   # includes masked partial-block rows (they still run)
    flops = 2 * rows * (K_IN * HIDDEN + HIDDEN * HIDDEN + HIDDEN * N_OUT_PAD)
    bytes_accessed = (
        rows * K_IN * 4                                                  # x f32
        + (K_IN * HIDDEN + HIDDEN * HIDDEN + HIDDEN * N_OUT_PAD) * 2     # w bf16
        + (HIDDEN + HIDDEN + N_OUT_PAD) * 4                              # biases
        + rows * N_OUT_PAD * 4                                           # output
    )

    out_padded = pl.pallas_call(
        mlp_kernel,
        out_shape=jax.ShapeDtypeStruct((B, N_OUT_PAD), jnp.float32),
        grid=grid,
        in_specs=[
            # x tile: pipelined along the batch grid; last dim == full dim (784).
            pl.BlockSpec((tm, K_IN), lambda i: (i, 0)),
            # Weights/biases: constant index_maps -> VMEM-resident across steps.
            pl.BlockSpec((K_IN, HIDDEN), lambda i: (0, 0)),      # w1
            pl.BlockSpec((1, HIDDEN), lambda i: (0, 0)),         # b1
            pl.BlockSpec((HIDDEN, HIDDEN), lambda i: (0, 0)),    # w2
            pl.BlockSpec((1, HIDDEN), lambda i: (0, 0)),         # b2
            pl.BlockSpec((HIDDEN, N_OUT_PAD), lambda i: (0, 0)),  # w3 (lane-dense)
            pl.BlockSpec((1, N_OUT_PAD), lambda i: (0, 0)),      # b3
        ],
        out_specs=pl.BlockSpec((tm, N_OUT_PAD), lambda i: (i, 0)),
        compiler_params=pltpu.CompilerParams(
            dimension_semantics=("parallel",),   # megacore sharding on v7x
            vmem_limit_bytes=32 << 20,           # headroom on v7x's 64 MiB VMEM
        ),
        cost_estimate=pl.CostEstimate(
            flops=flops, transcendentals=0, bytes_accessed=bytes_accessed),
    )(x2d, w1b, b1f, w2b, b2f, w3p, b3p)

    return out_padded[:, :N_OUT]


def init_params(key):
    """Mirrors torch.nn.Linear default init; weights stored (in, out)."""
    dims = [(K_IN, HIDDEN), (HIDDEN, HIDDEN), (HIDDEN, N_OUT)]
    params = []
    for fan_in, fan_out in dims:
        kw, kb, key = jax.random.split(key, 3)
        bound = 1.0 / (fan_in ** 0.5)
        w = jax.random.uniform(kw, (fan_in, fan_out), jnp.float32, -bound, bound)
        b = jax.random.uniform(kb, (1, fan_out), jnp.float32, -bound, bound)
        params.extend([w, b])
    return tuple(params)


def reference_forward_bf16(x_nchw, params):
    """Reference mirroring the kernel's numerics (bf16 operands, f32 accum)."""
    w1, b1, w2, b2, w3, b3 = params
    x = x_nchw.reshape(x_nchw.shape[0], -1).astype(jnp.bfloat16)
    h1 = jnp.maximum(
        jnp.dot(x, w1.astype(jnp.bfloat16),
                preferred_element_type=jnp.float32) + b1, 0.0)
    h2 = jnp.maximum(
        jnp.dot(h1.astype(jnp.bfloat16), w2.astype(jnp.bfloat16),
                preferred_element_type=jnp.float32) + b2, 0.0)
    return jnp.dot(h2.astype(jnp.bfloat16), w3.astype(jnp.bfloat16),
                   preferred_element_type=jnp.float32) + b3


def reference_forward_f32(x_nchw, params):
    w1, b1, w2, b2, w3, b3 = params
    x = x_nchw.reshape(x_nchw.shape[0], -1)
    h1 = jnp.maximum(x @ w1 + b1, 0.0)
    h2 = jnp.maximum(h1 @ w2 + b2, 0.0)
    return h2 @ w3 + b3


if __name__ == "__main__":
    key = jax.random.PRNGKey(0)
    kx, kp = jax.random.split(key)
    x = jax.random.normal(kx, (2, 1, 28, 28), jnp.float32)  # MNIST-shaped batch
    params = init_params(kp)
    prepared = prepare_params(params)   # one-time weight prep (hoisted)

    out = mlp_forward(x, prepared)
    out = jax.block_until_ready(out)
    assert out.shape == (2, 10)

    ref_bf16 = reference_forward_bf16(x, params)
    ref_f32 = reference_forward_f32(x, params)
    assert jnp.allclose(out, ref_bf16, atol=2e-2, rtol=2e-2), \
        "mismatch vs bf16-matched JAX reference"
    assert jnp.allclose(out, ref_f32, atol=1e-1, rtol=1e-1), \
        "mismatch vs f32 JAX reference (beyond bf16 quantization error)"
    print("KERNEL_OK")
</pallas_src>

<mosaic_0001>
module attributes {stable_mosaic.version = 11 : i64} {
  func.func @mlp_kernel(%arg0: i32, %arg1: memref<2x784xf32, #tpu.memory_space<vmem>>, %arg2: memref<784x512xbf16, #tpu.memory_space<vmem>>, %arg3: memref<1x512xf32, #tpu.memory_space<vmem>>, %arg4: memref<512x512xbf16, #tpu.memory_space<vmem>>, %arg5: memref<1x512xf32, #tpu.memory_space<vmem>>, %arg6: memref<512x128xbf16, #tpu.memory_space<vmem>>, %arg7: memref<1x128xf32, #tpu.memory_space<vmem>>, %arg8: memref<2x128xf32, #tpu.memory_space<vmem>>) attributes {dimension_semantics = [#tpu.dimension_semantics<parallel>], iteration_bounds = array<i64: 1>, scalar_prefetch = 0 : i64, scratch_operands = 0 : i64, tpu.core_type = #tpu.core_type<tc>, window_params = [{transform_indices = @transform_0, window_bounds = array<i64: 2, 784>}, {pipeline_mode = #tpu.pipeline_mode<synchronous>, transform_indices = @transform_1, window_bounds = array<i64: 784, 512>}, {pipeline_mode = #tpu.pipeline_mode<synchronous>, transform_indices = @transform_2, window_bounds = array<i64: 1, 512>}, {pipeline_mode = #tpu.pipeline_mode<synchronous>, transform_indices = @transform_3, window_bounds = array<i64: 512, 512>}, {pipeline_mode = #tpu.pipeline_mode<synchronous>, transform_indices = @transform_4, window_bounds = array<i64: 1, 512>}, {pipeline_mode = #tpu.pipeline_mode<synchronous>, transform_indices = @transform_5, window_bounds = array<i64: 512, 128>}, {pipeline_mode = #tpu.pipeline_mode<synchronous>, transform_indices = @transform_6, window_bounds = array<i64: 1, 128>}, {transform_indices = @transform_7, window_bounds = array<i64: 2, 128>}]} {
    %c0 = arith.constant 0 : index
    %c0_0 = arith.constant 0 : index
    %0 = vector.load %arg1[%c0, %c0_0] : memref<2x784xf32, #tpu.memory_space<vmem>>, vector<2x784xf32>
    %1 = arith.truncf %0 : vector<2x784xf32> to vector<2x784xbf16>
    %c0_1 = arith.constant 0 : index
    %c0_2 = arith.constant 0 : index
    %2 = vector.load %arg2[%c0_1, %c0_2] : memref<784x512xbf16, #tpu.memory_space<vmem>>, vector<784x512xbf16>
    %cst = arith.constant dense<0.000000e+00> : vector<2x512xf32>
    %3 = tpu.matmul %1, %2, %cst {dimension_numbers = #tpu.dot_dimension_numbers<[1], [0], [0], [1], [0, 0, 1, 1], [], []>} : vector<2x784xbf16>, vector<784x512xbf16>, vector<2x512xf32> -> vector<2x512xf32>
    %c0_3 = arith.constant 0 : index
    %c0_4 = arith.constant 0 : index
    %4 = vector.load %arg3[%c0_3, %c0_4] : memref<1x512xf32, #tpu.memory_space<vmem>>, vector<1x512xf32>
    %5 = vector.broadcast %4 : vector<1x512xf32> to vector<2x512xf32>
    %6 = arith.addf %3, %5 : vector<2x512xf32>
    %cst_5 = arith.constant 0.000000e+00 : f32
    %7 = vector.broadcast %cst_5 : f32 to vector<2x512xf32>
    %8 = arith.maximumf %6, %7 : vector<2x512xf32>
    %9 = arith.truncf %8 : vector<2x512xf32> to vector<2x512xbf16>
    %c0_6 = arith.constant 0 : index
    %c0_7 = arith.constant 0 : index
    %10 = vector.load %arg4[%c0_6, %c0_7] : memref<512x512xbf16, #tpu.memory_space<vmem>>, vector<512x512xbf16>
    %cst_8 = arith.constant dense<0.000000e+00> : vector<2x512xf32>
    %11 = tpu.matmul %9, %10, %cst_8 {dimension_numbers = #tpu.dot_dimension_numbers<[1], [0], [0], [1], [0, 0, 1, 1], [], []>} : vector<2x512xbf16>, vector<512x512xbf16>, vector<2x512xf32> -> vector<2x512xf32>
    %c0_9 = arith.constant 0 : index
    %c0_10 = arith.constant 0 : index
    %12 = vector.load %arg5[%c0_9, %c0_10] : memref<1x512xf32, #tpu.memory_space<vmem>>, vector<1x512xf32>
    %13 = vector.broadcast %12 : vector<1x512xf32> to vector<2x512xf32>
    %14 = arith.addf %11, %13 : vector<2x512xf32>
    %cst_11 = arith.constant 0.000000e+00 : f32
    %15 = vector.broadcast %cst_11 : f32 to vector<2x512xf32>
    %16 = arith.maximumf %14, %15 : vector<2x512xf32>
    %17 = arith.truncf %16 : vector<2x512xf32> to vector<2x512xbf16>
    %c0_12 = arith.constant 0 : index
    %c0_13 = arith.constant 0 : index
    %18 = vector.load %arg6[%c0_12, %c0_13] : memref<512x128xbf16, #tpu.memory_space<vmem>>, vector<512x128xbf16>
    %cst_14 = arith.constant dense<0.000000e+00> : vector<2x128xf32>
    %19 = tpu.matmul %17, %18, %cst_14 {dimension_numbers = #tpu.dot_dimension_numbers<[1], [0], [0], [1], [0, 0, 1, 1], [], []>} : vector<2x512xbf16>, vector<512x128xbf16>, vector<2x128xf32> -> vector<2x128xf32>
    %c0_15 = arith.constant 0 : index
    %c0_16 = arith.constant 0 : index
    %20 = vector.load %arg7[%c0_15, %c0_16] : memref<1x128xf32, #tpu.memory_space<vmem>>, vector<1x128xf32>
    %21 = vector.broadcast %20 : vector<1x128xf32> to vector<2x128xf32>
    %22 = arith.addf %19, %21 : vector<2x128xf32>
    %c0_17 = arith.constant 0 : index
    %c0_18 = arith.constant 0 : index
    %23 = vector.load %arg8[%c0_17, %c0_18] : memref<2x128xf32, #tpu.memory_space<vmem>>, vector<2x128xf32>
    tpu.vector_store %arg8[%c0_17, %c0_18], %22 {strides = array<i32>} : memref<2x128xf32, #tpu.memory_space<vmem>>, vector<2x128xf32>,
    return
  }
  func.func @transform_0(%arg0: i32) -> (i32, i32) {
    %c0_i32 = arith.constant 0 : i32
    %c0_i32_0 = arith.constant 0 : i32
    return %arg0, %c0_i32 : i32, i32
  }
  func.func @transform_1(%arg0: i32) -> (i32, i32) {
    %c0_i32 = arith.constant 0 : i32
    %c0_i32_0 = arith.constant 0 : i32
    %c0_i32_1 = arith.constant 0 : i32
    return %c0_i32, %c0_i32_0 : i32, i32
  }
  func.func @transform_2(%arg0: i32) -> (i32, i32) {
    %c0_i32 = arith.constant 0 : i32
    %c0_i32_0 = arith.constant 0 : i32
    %c0_i32_1 = arith.constant 0 : i32
    return %c0_i32, %c0_i32_0 : i32, i32
  }
  func.func @transform_3(%arg0: i32) -> (i32, i32) {
    %c0_i32 = arith.constant 0 : i32
    %c0_i32_0 = arith.constant 0 : i32
    %c0_i32_1 = arith.constant 0 : i32
    return %c0_i32, %c0_i32_0 : i32, i32
  }
  func.func @transform_4(%arg0: i32) -> (i32, i32) {
    %c0_i32 = arith.constant 0 : i32
    %c0_i32_0 = arith.constant 0 : i32
    %c0_i32_1 = arith.constant 0 : i32
    return %c0_i32, %c0_i32_0 : i32, i32
  }
  func.func @transform_5(%arg0: i32) -> (i32, i32) {
    %c0_i32 = arith.constant 0 : i32
    %c0_i32_0 = arith.constant 0 : i32
    %c0_i32_1 = arith.constant 0 : i32
    return %c0_i32, %c0_i32_0 : i32, i32
  }
  func.func @transform_6(%arg0: i32) -> (i32, i32) {
    %c0_i32 = arith.constant 0 : i32
    %c0_i32_0 = arith.constant 0 : i32
    %c0_i32_1 = arith.constant 0 : i32
    return %c0_i32, %c0_i32_0 : i32, i32
  }
  func.func @transform_7(%arg0: i32) -> (i32, i32) {
    %c0_i32 = arith.constant 0 : i32
    %c0_i32_0 = arith.constant 0 : i32
    return %arg0, %c0_i32 : i32, i32
  }
}

</mosaic_0001>

<llo_original>
// kernel: tpu_custom_call.1
$region0: #{tpu_custom_call.1}
  #allocation0 [shape = 'u32[]', space=smem, size = 0x4, offset = 0x4, fixed_abs, tag = 'smem constant byte address 0x4 - core index']
  #allocation1 [shape = 'u32[144,128]{1,0:T(1,128)}', space=vmem, size = 0x12000, scoped, tag = 'internal scratch']
  %s0 = inlined_call_operand.hbm [shape: f32[2,784], index: 0, kind: input, shape index: {}]
  %s1 = inlined_call_operand.hbm [shape: bf16[784,512], index: 1, kind: input, shape index: {}]
  %s2 = inlined_call_operand.vmem [shape: f32[1,512], index: 2, kind: input, shape index: {}]
  %s3 = inlined_call_operand.hbm [shape: bf16[512,512], index: 3, kind: input, shape index: {}]
  %s4 = inlined_call_operand.vmem [shape: f32[1,512], index: 4, kind: input, shape index: {}]
  %s5 = inlined_call_operand.hbm [shape: bf16[512,128], index: 5, kind: input, shape index: {}]
  %s6 = inlined_call_operand.vmem [shape: f32[1,128], index: 6, kind: input, shape index: {}]
  %s7 = inlined_call_operand.hbm [shape: f32[2,128], index: 7, kind: output, shape index: {}]
  %s8 = sld [smem:[#allocation0]]
  $region54: #{tpu_custom_call.1} parent=0
    _
  %s10 = ssub.s32 1, %s8
  %s11 = scalar_select 0, %s10, %s8
  $region1: #{tpu_custom_call.1} parent=0
    #allocation2 [shape = 'u8[7168]{0}', space=vmem, size = 0x1c00, scoped, tag = 'input window, operand 0, single buffered']
    #allocation3 [shape = 's32[1]{0}', space=sflag, size = 0x4, scoped, tag = 'scoped memory for tpu_custom_call.1']
    #allocation4 [shape = 's32[1]{0}', space=sflag, size = 0x4, scoped, tag = 'scoped memory for tpu_custom_call.1']
    #allocation5 [shape = 'u8[802816]{0}', space=vmem, size = 0xc4000, scoped, tag = 'input window, operand 1, single buffered']
    #allocation6 [shape = 's32[1]{0}', space=sflag, size = 0x4, scoped, tag = 'scoped memory for tpu_custom_call.1']
    #allocation7 [shape = 'u8[524288]{0}', space=vmem, size = 0x80000, scoped, tag = 'input window, operand 3, single buffered']
    #allocation8 [shape = 'u8[131072]{0}', space=vmem, size = 0x20000, scoped, tag = 'input window, operand 5, single buffered']
    #allocation9 [shape = 's32[1]{0}', space=sflag, size = 0x4, scoped, tag = 'scoped memory for tpu_custom_call.1']
    #allocation10 [shape = 'u8[1024]{0}', space=vmem, size = 0x400, scoped, tag = 'output window, operand 0, single buffered']
    %12 = vsyncpa [#allocation3], 0
    %13 = vsyncpa [#allocation6], 0
    %14 = vsyncpa [#allocation9], 0
    %15 = vsyncpa [#allocation4], 0
    // Predicated region
    $region2: #{tpu_custom_call.1} parent=1 // pred_check
      _
    $region3: #{tpu_custom_call.1} parent=1 // pred_check_branch
      %17 = sbr.rel (0) target = $region5
    $region4: #{tpu_custom_call.1} parent=1 // pred_region
      %s19 = ssub.s32 224, 224
      %20 = vsyncadd [#allocation3], %s19
      %s22 = sshll.u32 [#allocation2], 4
      %s23 = int_to_ptr.vmem [resolvable:$true] %s22
      %25 = dma.hbm_to_vmem [thread:$0]  %s0, 224, %s23, [#allocation3]
    $region5: #{tpu_custom_call.1} parent=1 // pred_fallthru
      _
    // Predicated region
    $region6: #{tpu_custom_call.1} parent=1 // pred_check
      _
    $region7: #{tpu_custom_call.1} parent=1 // pred_check_branch
      %27 = sbr.rel (0) target = $region9
    $region8: #{tpu_custom_call.1} parent=1 // pred_region
      %s29 = ssub.s32 25088, 25088
      %30 = vsyncadd [#allocation6], %s29
      %s31 = sshll.u32 [#allocation5], 4
      %s32 = int_to_ptr.vmem [resolvable:$true] %s31
      %37 = dma.hbm_to_vmem [thread:$0]  %s1, 25088, %s32, [#allocation6], 256, 256, 16
    $region9: #{tpu_custom_call.1} parent=1 // pred_fallthru
      _
    // Predicated region
    $region10: #{tpu_custom_call.1} parent=1 // pred_check
      _
    $region11: #{tpu_custom_call.1} parent=1 // pred_check_branch
      %39 = sbr.rel (0) target = $region13
    $region12: #{tpu_custom_call.1} parent=1 // pred_region
      _
    $region13: #{tpu_custom_call.1} parent=1 // pred_fallthru
      _
    // Predicated region
    $region14: #{tpu_custom_call.1} parent=1 // pred_check
      _
    $region15: #{tpu_custom_call.1} parent=1 // pred_check_branch
      %41 = sbr.rel (0) target = $region17
    $region16: #{tpu_custom_call.1} parent=1 // pred_region
      %s43 = ssub.s32 16384, 16384
      %44 = vsyncadd [#allocation6], %s43
      %s45 = sshll.u32 [#allocation7], 4
      %s46 = int_to_ptr.vmem [resolvable:$true] %s45
      %51 = dma.hbm_to_vmem [thread:$0]  %s3, 16384, %s46, [#allocation6], 256, 256, 16
    $region17: #{tpu_custom_call.1} parent=1 // pred_fallthru
      _
    // Predicated region
    $region18: #{tpu_custom_call.1} parent=1 // pred_check
      _
    $region19: #{tpu_custom_call.1} parent=1 // pred_check_branch
      %53 = sbr.rel (0) target = $region21
    $region20: #{tpu_custom_call.1} parent=1 // pred_region
      _
    $region21: #{tpu_custom_call.1} parent=1 // pred_fallthru
      _
    // Predicated region
    $region22: #{tpu_custom_call.1} parent=1 // pred_check
      _
    $region23: #{tpu_custom_call.1} parent=1 // pred_check_branch
      %55 = sbr.rel (0) target = $region25
    $region24: #{tpu_custom_call.1} parent=1 // pred_region
      %s57 = ssub.s32 4096, 4096
      %58 = vsyncadd [#allocation9], %s57
      %s59 = sshll.u32 [#allocation8], 4
      %s60 = int_to_ptr.vmem [resolvable:$true] %s59
      %65 = dma.hbm_to_vmem [thread:$0]  %s5, 4096, %s60, [#allocation9], 64, 64, 4
    $region25: #{tpu_custom_call.1} parent=1 // pred_fallthru
      _
    // Predicated region
    $region26: #{tpu_custom_call.1} parent=1 // pred_check
      _
    $region27: #{tpu_custom_call.1} parent=1 // pred_check_branch
      %67 = sbr.rel (0) target = $region29
    $region28: #{tpu_custom_call.1} parent=1 // pred_region
      _
    $region29: #{tpu_custom_call.1} parent=1 // pred_fallthru
      _
    // Predicated region
    $region30: #{tpu_custom_call.1} parent=1 // pred_check
      _
    $region31: #{tpu_custom_call.1} parent=1 // pred_check_branch
      %69 = sbr.rel (0) target = $region33
    $region32: #{tpu_custom_call.1} parent=1 // pred_region
      %70 = dma.done [#allocation3], 224
    $region33: #{tpu_custom_call.1} parent=1 // pred_fallthru
      _
    // Predicated region
    $region34: #{tpu_custom_call.1} parent=1 // pred_check
      _
    $region35: #{tpu_custom_call.1} parent=1 // pred_check_branch
      %72 = sbr.rel (0) target = $region37
    $region36: #{tpu_custom_call.1} parent=1 // pred_region
      %73 = dma.done [#allocation6], 25088
    $region37: #{tpu_custom_call.1} parent=1 // pred_fallthru
      _
    // Predicated region
    $region38: #{tpu_custom_call.1} parent=1 // pred_check
      _
    $region39: #{tpu_custom_call.1} parent=1 // pred_check_branch
      %75 = sbr.rel (0) target = $region41
    $region40: #{tpu_custom_call.1} parent=1 // pred_region
      %76 = dma.done [#allocation6], 16384
    $region41: #{tpu_custom_call.1} parent=1 // pred_fallthru
      _
    // Predicated region
    $region42: #{tpu_custom_call.1} parent=1 // pred_check
      _
    $region43: #{tpu_custom_call.1} parent=1 // pred_check_branch
      %78 = sbr.rel (0) target = $region45
    $region44: #{tpu_custom_call.1} parent=1 // pred_region
      %79 = dma.done [#allocation9], 4096
    $region45: #{tpu_custom_call.1} parent=1 // pred_fallthru
      _
    %v81 = vld [vmem:[#allocation2] sm:$0xff]
    %v82 = vld [vmem:[#allocation2 + $0x8] sm:$0x3f]
    %v85 = vcombine.high %v81, %v81
    %v87 = vunpack.c.l.s4 1983009808
    %v88 = vunpack.c.0.s8 %v87
    %v89 = vlaneseq
    %v90 = vshrl.u32 %v89, 7
    %v91 = vsub.s32 %v88, %v90
    %v92 = vrot.slane %v81, %v91
    %v94 = vunpack.c.l.s4 1983009808
    %v95 = vunpack.c.0.s8 %v94
    %v96 = vlaneseq
    %v97 = vshrl.u32 %v96, 7
    %v98 = vsub.s32 %v95, %v97
    %v99 = vrot.slane %v85, %v98
    %v100 = vcombine.high %v92, %v92
    %v101 = vcombine.high %v99, %v99
    %v102 = vcombine.high %v82, %v82
    %v104 = vunpack.c.l.s4 1983009808
    %v105 = vunpack.c.0.s8 %v104
    %v106 = vlaneseq
    %v107 = vshrl.u32 %v106, 7
    %v108 = vsub.s32 %v105, %v107
    %v109 = vrot.slane %v82, %v108
    %v111 = vunpack.c.l.s4 1983009808
    %v112 = vunpack.c.0.s8 %v111
    %v113 = vlaneseq
    %v114 = vshrl.u32 %v113, 7
    %v115 = vsub.s32 %v112, %v114
    %v116 = vrot.slane %v102, %v115
    %v117 = vcombine.high %v109, %v109
    %v125 = vpack.c.bf16 %v92, %v92
    %v126 = vpack.c.bf16 %v100, %v100
    %v127 = vpack.c.bf16 %v99, %v99
    %v128 = vpack.c.bf16 %v101, %v101
    %v129 = vpack.c.bf16 %v109, %v109
    %v130 = vpack.c.bf16 %v117, %v117
    %v131 = vpack.c.bf16 %v116, %v116
    %v132 = vld [vmem:[#allocation5] sm:$0xff]
    %v133 = vld [vmem:[#allocation5 + $0x8] sm:$0xff]
    %v134 = vld [vmem:[#allocation5 + $0x10] sm:$0xff]
    %v135 = vld [vmem:[#allocation5 + $0x18] sm:$0xff]
    %v136 = vld [vmem:[#allocation5 + $0x20] sm:$0xff]
    %v137 = vld [vmem:[#allocation5 + $0x28] sm:$0xff]
    %v138 = vld [vmem:[#allocation5 + $0x30] sm:$0xff]
    %v139 = vld [vmem:[#allocation5 + $0x38] sm:$0xff]
    %v140 = vld [vmem:[#allocation5 + $0x40] sm:$0xff]
    %v141 = vld [vmem:[#allocation5 + $0x48] sm:$0xff]
    %v142 = vld [vmem:[#allocation5 + $0x50] sm:$0xff]
    %v143 = vld [vmem:[#allocation5 + $0x58] sm:$0xff]
    %v144 = vld [vmem:[#allocation5 + $0x60] sm:$0xff]
    %v145 = vld [vmem:[#allocation5 + $0x68] sm:$0xff]
    %v146 = vld [vmem:[#allocation5 + $0x70] sm:$0xff]
    %v147 = vld [vmem:[#allocation5 + $0x78] sm:$0xff]
    %v148 = vld [vmem:[#allocation5 + $0x80] sm:$0xff]
    %v149 = vld [vmem:[#allocation5 + $0x88] sm:$0xff]
    %v150 = vld [vmem:[#allocation5 + $0x90] sm:$0xff]
    %v151 = vld [vmem:[#allocation5 + $0x98] sm:$0xff]
    %v152 = vld [vmem:[#allocation5 + $0xa0] sm:$0xff]
    %v153 = vld [vmem:[#allocation5 + $0xa8] sm:$0xff]
    %v154 = vld [vmem:[#allocation5 + $0xb0] sm:$0xff]
    %v155 = vld [vmem:[#allocation5 + $0xb8] sm:$0xff]
    %v156 = vld [vmem:[#allocation5 + $0xc0] sm:$0xff]
    %v157 = vld [vmem:[#allocation5 + $0xc8] sm:$0xff]
    %v158 = vld [vmem:[#allocation5 + $0xd0] sm:$0xff]
    %v159 = vld [vmem:[#allocation5 + $0xd8] sm:$0xff]
    %v160 = vld [vmem:[#allocation5 + $0xe0] sm:$0xff]
    %v161 = vld [vmem:[#allocation5 + $0xe8] sm:$0xff]
    %v162 = vld [vmem:[#allocation5 + $0xf0] sm:$0xff]
    %v163 = vld [vmem:[#allocation5 + $0xf8] sm:$0xff]
    %v164 = vld [vmem:[#allocation5 + $0x100] sm:$0xff]
    %v165 = vld [vmem:[#allocation5 + $0x108] sm:$0xff]
    %v166 = vld [vmem:[#allocation5 + $0x110] sm:$0xff]
    %v167 = vld [vmem:[#allocation5 + $0x118] sm:$0xff]
    %v168 = vld [vmem:[#allocation5 + $0x120] sm:$0xff]
    %v169 = vld [vmem:[#allocation5 + $0x128] sm:$0xff]
    %v170 = vld [vmem:[#allocation5 + $0x130] sm:$0xff]
    %v171 = vld [vmem:[#allocation5 + $0x138] sm:$0xff]
    %v172 = vld [vmem:[#allocation5 + $0x140] sm:$0xff]
    %v173 = vld [vmem:[#allocation5 + $0x148] sm:$0xff]
    %v174 = vld [vmem:[#allocation5 + $0x150] sm:$0xff]
    %v175 = vld [vmem:[#allocation5 + $0x158] sm:$0xff]
    %v176 = vld [vmem:[#allocation5 + $0x160] sm:$0xff]
    %v177 = vld [vmem:[#allocation5 + $0x168] sm:$0xff]
    %v178 = vld [vmem:[#allocation5 + $0x170] sm:$0xff]
    %v179 = vld [vmem:[#allocation5 + $0x178] sm:$0xff]
    %v180 = vld [vmem:[#allocation5 + $0x180] sm:$0xff]
    %v181 = vld [vmem:[#allocation5 + $0x188] sm:$0xff]
    %v182 = vld [vmem:[#allocation5 + $0x190] sm:$0xff]
    %v183 = vld [vmem:[#allocation5 + $0x198] sm:$0xff]
    %v184 = vld [vmem:[#allocation5 + $0x1a0] sm:$0xff]
    %v185 = vld [vmem:[#allocation5 + $0x1a8] sm:$0xff]
    %v186 = vld [vmem:[#allocation5 + $0x1b0] sm:$0xff]
    %v187 = vld [vmem:[#allocation5 + $0x1b8] sm:$0xff]
    %v188 = vld [vmem:[#allocation5 + $0x1c0] sm:$0xff]
    %v189 = vld [vmem:[#allocation5 + $0x1c8] sm:$0xff]
    %v190 = vld [vmem:[#allocation5 + $0x1d0] sm:$0xff]
    %v191 = vld [vmem:[#allocation5 + $0x1d8] sm:$0xff]
    %v192 = vld [vmem:[#allocation5 + $0x1e0] sm:$0xff]
    %v193 = vld [vmem:[#allocation5 + $0x1e8] sm:$0xff]
    %v194 = vld [vmem:[#allocation5 + $0x1f0] sm:$0xff]
    %v195 = vld [vmem:[#allocation5 + $0x1f8] sm:$0xff]
    %v196 = vld [vmem:[#allocation5 + $0x200] sm:$0xff]
    %v197 = vld [vmem:[#allocation5 + $0x208] sm:$0xff]
    %v198 = vld [vmem:[#allocation5 + $0x210] sm:$0xff]
    %v199 = vld [vmem:[#allocation5 + $0x218] sm:$0xff]
    %v200 = vld [vmem:[#allocation5 + $0x220] sm:$0xff]
    %v201 = vld [vmem:[#allocation5 + $0x228] sm:$0xff]
    %v202 = vld [vmem:[#allocation5 + $0x230] sm:$0xff]
    %v203 = vld [vmem:[#allocation5 + $0x238] sm:$0xff]
    %v204 = vld [vmem:[#allocation5 + $0x240] sm:$0xff]
    %v205 = vld [vmem:[#allocation5 + $0x248] sm:$0xff]
    %v206 = vld [vmem:[#allocation5 + $0x250] sm:$0xff]
    %v207 = vld [vmem:[#allocation5 + $0x258] sm:$0xff]
    %v208 = vld [vmem:[#allocation5 + $0x260] sm:$0xff]
    %v209 = vld [vmem:[#allocation5 + $0x268] sm:$0xff]
    %v210 = vld [vmem:[#allocation5 + $0x270] sm:$0xff]
    %v211 = vld [vmem:[#allocation5 + $0x278] sm:$0xff]
    %v212 = vld [vmem:[#allocation5 + $0x280] sm:$0xff]
    %v213 = vld [vmem:[#allocation5 + $0x288] sm:$0xff]
    %v214 = vld [vmem:[#allocation5 + $0x290] sm:$0xff]
    %v215 = vld [vmem:[#allocation5 + $0x298] sm:$0xff]
    %v216 = vld [vmem:[#allocation5 + $0x2a0] sm:$0xff]
    %v217 = vld [vmem:[#allocation5 + $0x2a8] sm:$0xff]
    %v218 = vld [vmem:[#allocation5 + $0x2b0] sm:$0xff]
    %v219 = vld [vmem:[#allocation5 + $0x2b8] sm:$0xff]
    %v220 = vld [vmem:[#allocation5 + $0x2c0] sm:$0xff]
    %v221 = vld [vmem:[#allocation5 + $0x2c8] sm:$0xff]
    %v222 = vld [vmem:[#allocation5 + $0x2d0] sm:$0xff]
    %v223 = vld [vmem:[#allocation5 + $0x2d8] sm:$0xff]
    %v224 = vld [vmem:[#allocation5 + $0x2e0] sm:$0xff]
    %v225 = vld [vmem:[#allocation5 + $0x2e8] sm:$0xff]
    %v226 = vld [vmem:[#allocation5 + $0x2f0] sm:$0xff]
    %v227 = vld [vmem:[#allocation5 + $0x2f8] sm:$0xff]
    %v228 = vld [vmem:[#allocation5 + $0x300] sm:$0xff]
    %v229 = vld [vmem:[#allocation5 + $0x308] sm:$0xff]
    %v230 = vld [vmem:[#allocation5 + $0x310] sm:$0xff]
    %v231 = vld [vmem:[#allocation5 + $0x318] sm:$0xff]
    %v232 = vld [vmem:[#allocation5 + $0x320] sm:$0xff]
    %v233 = vld [vmem:[#allocation5 + $0x328] sm:$0xff]
    %v234 = vld [vmem:[#allocation5 + $0x330] sm:$0xff]
    %v235 = vld [vmem:[#allocation5 + $0x338] sm:$0xff]
    %v236 = vld [vmem:[#allocation5 + $0x340] sm:$0xff]
    %v237 = vld [vmem:[#allocation5 + $0x348] sm:$0xff]
    %v238 = vld [vmem:[#allocation5 + $0x350] sm:$0xff]
    %v239 = vld [vmem:[#allocation5 + $0x358] sm:$0xff]
    %v240 = vld [vmem:[#allocation5 + $0x360] sm:$0xff]
    %v241 = vld [vmem:[#allocation5 + $0x368] sm:$0xff]
    %v242 = vld [vmem:[#allocation5 + $0x370] sm:$0xff]
    %v243 = vld [vmem:[#allocation5 + $0x378] sm:$0xff]
    %v244 = vld [vmem:[#allocation5 + $0x380] sm:$0xff]
    %v245 = vld [vmem:[#allocation5 + $0x388] sm:$0xff]
    %v246 = vld [vmem:[#allocation5 + $0x390] sm:$0xff]
    %v247 = vld [vmem:[#allocation5 + $0x398] sm:$0xff]
    %v248 = vld [vmem:[#allocation5 + $0x3a0] sm:$0xff]
    %v249 = vld [vmem:[#allocation5 + $0x3a8] sm:$0xff]
    %v250 = vld [vmem:[#allocation5 + $0x3b0] sm:$0xff]
    %v251 = vld [vmem:[#allocation5 + $0x3b8] sm:$0xff]
    %v252 = vld [vmem:[#allocation5 + $0x3c0] sm:$0xff]
    %v253 = vld [vmem:[#allocation5 + $0x3c8] sm:$0xff]
    %v254 = vld [vmem:[#allocation5 + $0x3d0] sm:$0xff]
    %v255 = vld [vmem:[#allocation5 + $0x3d8] sm:$0xff]
    %v256 = vld [vmem:[#allocation5 + $0x3e0] sm:$0xff]
    %v257 = vld [vmem:[#allocation5 + $0x3e8] sm:$0xff]
    %v258 = vld [vmem:[#allocation5 + $0x3f0] sm:$0xff]
    %v259 = vld [vmem:[#allocation5 + $0x3f8] sm:$0xff]
    %v260 = vld [vmem:[#allocation5 + $0x400] sm:$0xff]
    %v261 = vld [vmem:[#allocation5 + $0x408] sm:$0xff]
    %v262 = vld [vmem:[#allocation5 + $0x410] sm:$0xff]
    %v263 = vld [vmem:[#allocation5 + $0x418] sm:$0xff]
    %v264 = vld [vmem:[#allocation5 + $0x420] sm:$0xff]
    %v265 = vld [vmem:[#allocation5 + $0x428] sm:$0xff]
    %v266 = vld [vmem:[#allocation5 + $0x430] sm:$0xff]
    %v267 = vld [vmem:[#allocation5 + $0x438] sm:$0xff]
    %v268 = vld [vmem:[#allocation5 + $0x440] sm:$0xff]
    %v269 = vld [vmem:[#allocation5 + $0x448] sm:$0xff]
    %v270 = vld [vmem:[#allocation5 + $0x450] sm:$0xff]
    %v271 = vld [vmem:[#allocation5 + $0x458] sm:$0xff]
    %v272 = vld [vmem:[#allocation5 + $0x460] sm:$0xff]
    %v273 = vld [vmem:[#allocation5 + $0x468] sm:$0xff]
    %v274 = vld [vmem:[#allocation5 + $0x470] sm:$0xff]
    %v275 = vld [vmem:[#allocation5 + $0x478] sm:$0xff]
    %v276 = vld [vmem:[#allocation5 + $0x480] sm:$0xff]
    %v277 = vld [vmem:[#allocation5 + $0x488] sm:$0xff]
    %v278 = vld [vmem:[#allocation5 + $0x490] sm:$0xff]
    %v279 = vld [vmem:[#allocation5 + $0x498] sm:$0xff]
    %v280 = vld [vmem:[#allocation5 + $0x4a0] sm:$0xff]
    %v281 = vld [vmem:[#allocation5 + $0x4a8] sm:$0xff]
    %v282 = vld [vmem:[#allocation5 + $0x4b0] sm:$0xff]
    %v283 = vld [vmem:[#allocation5 + $0x4b8] sm:$0xff]
    %v284 = vld [vmem:[#allocation5 + $0x4c0] sm:$0xff]
    %v285 = vld [vmem:[#allocation5 + $0x4c8] sm:$0xff]
    %v286 = vld [vmem:[#allocation5 + $0x4d0] sm:$0xff]
    %v287 = vld [vmem:[#allocation5 + $0x4d8] sm:$0xff]
    %v288 = vld [vmem:[#allocation5 + $0x4e0] sm:$0xff]
    %v289 = vld [vmem:[#allocation5 + $0x4e8] sm:$0xff]
    %v290 = vld [vmem:[#allocation5 + $0x4f0] sm:$0xff]
    %v291 = vld [vmem:[#allocation5 + $0x4f8] sm:$0xff]
    %v292 = vld [vmem:[#allocation5 + $0x500] sm:$0xff]
    %v293 = vld [vmem:[#allocation5 + $0x508] sm:$0xff]
    %v294 = vld [vmem:[#allocation5 + $0x510] sm:$0xff]
    %v295 = vld [vmem:[#allocation5 + $0x518] sm:$0xff]
    %v296 = vld [vmem:[#allocation5 + $0x520] sm:$0xff]
    %v297 = vld [vmem:[#allocation5 + $0x528] sm:$0xff]
    %v298 = vld [vmem:[#allocation5 + $0x530] sm:$0xff]
    %v299 = vld [vmem:[#allocation5 + $0x538] sm:$0xff]
    %v300 = vld [vmem:[#allocation5 + $0x540] sm:$0xff]
    %v301 = vld [vmem:[#allocation5 + $0x548] sm:$0xff]
    %v302 = vld [vmem:[#allocation5 + $0x550] sm:$0xff]
    %v303 = vld [vmem:[#allocation5 + $0x558] sm:$0xff]
    %v304 = vld [vmem:[#allocation5 + $0x560] sm:$0xff]
    %v305 = vld [vmem:[#allocation5 + $0x568] sm:$0xff]
    %v306 = vld [vmem:[#allocation5 + $0x570] sm:$0xff]
    %v307 = vld [vmem:[#allocation5 + $0x578] sm:$0xff]
    %v308 = vld [vmem:[#allocation5 + $0x580] sm:$0xff]
    %v309 = vld [vmem:[#allocation5 + $0x588] sm:$0xff]
    %v310 = vld [vmem:[#allocation5 + $0x590] sm:$0xff]
    %v311 = vld [vmem:[#allocation5 + $0x598] sm:$0xff]
    %v312 = vld [vmem:[#allocation5 + $0x5a0] sm:$0xff]
    %v313 = vld [vmem:[#allocation5 + $0x5a8] sm:$0xff]
    %v314 = vld [vmem:[#allocation5 + $0x5b0] sm:$0xff]
    %v315 = vld [vmem:[#allocation5 + $0x5b8] sm:$0xff]
    %v316 = vld [vmem:[#allocation5 + $0x5c0] sm:$0xff]
    %v317 = vld [vmem:[#allocation5 + $0x5c8] sm:$0xff]
    %v318 = vld [vmem:[#allocation5 + $0x5d0] sm:$0xff]
    %v319 = vld [vmem:[#allocation5 + $0x5d8] sm:$0xff]
    %v320 = vld [vmem:[#allocation5 + $0x5e0] sm:$0xff]
    %v321 = vld [vmem:[#allocation5 + $0x5e8] sm:$0xff]
    %v322 = vld [vmem:[#allocation5 + $0x5f0] sm:$0xff]
    %v323 = vld [vmem:[#allocation5 + $0x5f8] sm:$0xff]
    %v324 = vld [vmem:[#allocation5 + $0x600] sm:$0xff]
    %v325 = vld [vmem:[#allocation5 + $0x608] sm:$0xff]
    %v326 = vld [vmem:[#allocation5 + $0x610] sm:$0xff]
    %v327 = vld [vmem:[#allocation5 + $0x618] sm:$0xff]
    %v328 = vld [vmem:[%s2] sm:$0xf]
    %v330 = vlaneseq
    %v331 = vshrl.u32 %v330, 7
    %v332 = vsub.s32 0, %v331
    %v333 = vrot.slane %v328, %v332
    %v334 = vlaneseq
    %v335 = vshrl.u32 %v334, 7
    %v336 = vsub.s32 1, %v335
    %v337 = vrot.slane %v328, %v336
    %v338 = vlaneseq
    %v339 = vshrl.u32 %v338, 7
    %v340 = vsub.s32 2, %v339
    %v341 = vrot.slane %v328, %v340
    %v342 = vlaneseq
    %v343 = vshrl.u32 %v342, 7
    %v344 = vsub.s32 3, %v343
    %v345 = vrot.slane %v328, %v344
    %v546 = vunpack.c.l.b16 %v132
    %v547 = vunpack.c.h.b16 %v132
    %v548 = vunpack.c.l.b16 %v133
    %v549 = vunpack.c.h.b16 %v133
    %v550 = vunpack.c.l.b16 %v134
    %v551 = vunpack.c.h.b16 %v134
    %v552 = vunpack.c.l.b16 %v135
    %v553 = vunpack.c.h.b16 %v135
    %v554 = vunpack.c.l.b16 %v136
    %v555 = vunpack.c.h.b16 %v136
    %v556 = vunpack.c.l.b16 %v137
    %v557 = vunpack.c.h.b16 %v137
    %v558 = vunpack.c.l.b16 %v138
    %v559 = vunpack.c.h.b16 %v138
    %v560 = vunpack.c.l.b16 %v139
    %v561 = vunpack.c.h.b16 %v139
    %v562 = vunpack.c.l.b16 %v140
    %v563 = vunpack.c.h.b16 %v140
    %v564 = vunpack.c.l.b16 %v141
    %v565 = vunpack.c.h.b16 %v141
    %v566 = vunpack.c.l.b16 %v142
    %v567 = vunpack.c.h.b16 %v142
    %v568 = vunpack.c.l.b16 %v143
    %v569 = vunpack.c.h.b16 %v143
    %v570 = vunpack.c.l.b16 %v144
    %v571 = vunpack.c.h.b16 %v144
    %v572 = vunpack.c.l.b16 %v145
    %v573 = vunpack.c.h.b16 %v145
    %v574 = vunpack.c.l.b16 %v146
    %v575 = vunpack.c.h.b16 %v146
    %v576 = vunpack.c.l.b16 %v147
    %v577 = vunpack.c.h.b16 %v147
    %v578 = vunpack.c.l.b16 %v148
    %v579 = vunpack.c.h.b16 %v148
    %v580 = vunpack.c.l.b16 %v149
    %v581 = vunpack.c.h.b16 %v149
    %v582 = vunpack.c.l.b16 %v150
    %v583 = vunpack.c.h.b16 %v150
    %v584 = vunpack.c.l.b16 %v151
    %v585 = vunpack.c.h.b16 %v151
    %v586 = vunpack.c.l.b16 %v152
    %v587 = vunpack.c.h.b16 %v152
    %v588 = vunpack.c.l.b16 %v153
    %v589 = vunpack.c.h.b16 %v153
    %v590 = vunpack.c.l.b16 %v154
    %v591 = vunpack.c.h.b16 %v154
    %v592 = vunpack.c.l.b16 %v155
    %v593 = vunpack.c.h.b16 %v155
    %v594 = vunpack.c.l.b16 %v156
    %v595 = vunpack.c.h.b16 %v156
    %v596 = vunpack.c.l.b16 %v157
    %v597 = vunpack.c.h.b16 %v157
    %v598 = vunpack.c.l.b16 %v158
    %v599 = vunpack.c.h.b16 %v158
    %v600 = vunpack.c.l.b16 %v159
    %v601 = vunpack.c.h.b16 %v159
    %v602 = vunpack.c.l.b16 %v160
    %v603 = vunpack.c.h.b16 %v160
    %v604 = vunpack.c.l.b16 %v161
    %v605 = vunpack.c.h.b16 %v161
    %v606 = vunpack.c.l.b16 %v162
    %v607 = vunpack.c.h.b16 %v162
    %v608 = vunpack.c.l.b16 %v163
    %v609 = vunpack.c.h.b16 %v163
    %v610 = vunpack.c.l.b16 %v164
    %v611 = vunpack.c.h.b16 %v164
    %v612 = vunpack.c.l.b16 %v165
    %v613 = vunpack.c.h.b16 %v165
    %v614 = vunpack.c.l.b16 %v166
    %v615 = vunpack.c.h.b16 %v166
    %v616 = vunpack.c.l.b16 %v167
    %v617 = vunpack.c.h.b16 %v167
    %v618 = vunpack.c.l.b16 %v168
    %v619 = vunpack.c.h.b16 %v168
    %v620 = vunpack.c.l.b16 %v169
    %v621 = vunpack.c.h.b16 %v169
    %v622 = vunpack.c.l.b16 %v170
    %v623 = vunpack.c.h.b16 %v170
    %v624 = vunpack.c.l.b16 %v171
    %v625 = vunpack.c.h.b16 %v171
    %v626 = vunpack.c.l.b16 %v172
    %v627 = vunpack.c.h.b16 %v172
    %v628 = vunpack.c.l.b16 %v173
    %v629 = vunpack.c.h.b16 %v173
    %v630 = vunpack.c.l.b16 %v174
    %v631 = vunpack.c.h.b16 %v174
    %v632 = vunpack.c.l.b16 %v175
    %v633 = vunpack.c.h.b16 %v175
    %v634 = vunpack.c.l.b16 %v176
    %v635 = vunpack.c.h.b16 %v176
    %v636 = vunpack.c.l.b16 %v177
    %v637 = vunpack.c.h.b16 %v177
    %v638 = vunpack.c.l.b16 %v178
    %v639 = vunpack.c.h.b16 %v178
    %v640 = vunpack.c.l.b16 %v179
    %v641 = vunpack.c.h.b16 %v179
    %v642 = vunpack.c.l.b16 %v180
    %v643 = vunpack.c.h.b16 %v180
    %v644 = vunpack.c.l.b16 %v181
    %v645 = vunpack.c.h.b16 %v181
    %v646 = vunpack.c.l.b16 %v182
    %v647 = vunpack.c.h.b16 %v182
    %v648 = vunpack.c.l.b16 %v183
    %v649 = vunpack.c.h.b16 %v183
    %v650 = vunpack.c.l.b16 %v184
    %v651 = vunpack.c.h.b16 %v184
    %v652 = vunpack.c.l.b16 %v185
    %v653 = vunpack.c.h.b16 %v185
    %v654 = vunpack.c.l.b16 %v186
    %v655 = vunpack.c.h.b16 %v186
    %v656 = vunpack.c.l.b16 %v187
    %v657 = vunpack.c.h.b16 %v187
    %v658 = vunpack.c.l.b16 %v188
    %v659 = vunpack.c.h.b16 %v188
    %v660 = vunpack.c.l.b16 %v189
    %v661 = vunpack.c.h.b16 %v189
    %v662 = vunpack.c.l.b16 %v190
    %v663 = vunpack.c.h.b16 %v190
    %v664 = vunpack.c.l.b16 %v191
    %v665 = vunpack.c.h.b16 %v191
    %v666 = vunpack.c.l.b16 %v192
    %v667 = vunpack.c.h.b16 %v192
    %v668 = vunpack.c.l.b16 %v193
    %v669 = vunpack.c.h.b16 %v193
    %v670 = vunpack.c.l.b16 %v194
    %v671 = vunpack.c.h.b16 %v194
    %v672 = vunpack.c.l.b16 %v195
    %v673 = vunpack.c.h.b16 %v195
    %v674 = vunpack.c.l.b16 %v196
    %v675 = vunpack.c.h.b16 %v196
    %v676 = vunpack.c.l.b16 %v197
    %v677 = vunpack.c.h.b16 %v197
    %v678 = vunpack.c.l.b16 %v198
    %v679 = vunpack.c.h.b16 %v198
    %v680 = vunpack.c.l.b16 %v199
    %v681 = vunpack.c.h.b16 %v199
    %v682 = vunpack.c.l.b16 %v200
    %v683 = vunpack.c.h.b16 %v200
    %v684 = vunpack.c.l.b16 %v201
    %v685 = vunpack.c.h.b16 %v201
    %v686 = vunpack.c.l.b16 %v202
    %v687 = vunpack.c.h.b16 %v202
    %v688 = vunpack.c.l.b16 %v203
    %v689 = vunpack.c.h.b16 %v203
    %v690 = vunpack.c.l.b16 %v204
    %v691 = vunpack.c.h.b16 %v204
    %v692 = vunpack.c.l.b16 %v205
    %v693 = vunpack.c.h.b16 %v205
    %v694 = vunpack.c.l.b16 %v206
    %v695 = vunpack.c.h.b16 %v206
    %v696 = vunpack.c.l.b16 %v207
    %v697 = vunpack.c.h.b16 %v207
    %v698 = vunpack.c.l.b16 %v208
    %v699 = vunpack.c.h.b16 %v208
    %v700 = vunpack.c.l.b16 %v209
    %v701 = vunpack.c.h.b16 %v209
    %v702 = vunpack.c.l.b16 %v210
    %v703 = vunpack.c.h.b16 %v210
    %v704 = vunpack.c.l.b16 %v211
    %v705 = vunpack.c.h.b16 %v211
    %v706 = vunpack.c.l.b16 %v212
    %v707 = vunpack.c.h.b16 %v212
    %v708 = vunpack.c.l.b16 %v213
    %v709 = vunpack.c.h.b16 %v213
    %v710 = vunpack.c.l.b16 %v214
    %v711 = vunpack.c.h.b16 %v214
    %v712 = vunpack.c.l.b16 %v215
    %v713 = vunpack.c.h.b16 %v215
    %v714 = vunpack.c.l.b16 %v216
    %v715 = vunpack.c.h.b16 %v216
    %v716 = vunpack.c.l.b16 %v217
    %v717 = vunpack.c.h.b16 %v217
    %v718 = vunpack.c.l.b16 %v218
    %v719 = vunpack.c.h.b16 %v218
    %v720 = vunpack.c.l.b16 %v219
    %v721 = vunpack.c.h.b16 %v219
    %v722 = vunpack.c.l.b16 %v220
    %v723 = vunpack.c.h.b16 %v220
    %v724 = vunpack.c.l.b16 %v221
    %v725 = vunpack.c.h.b16 %v221
    %v726 = vunpack.c.l.b16 %v222
    %v727 = vunpack.c.h.b16 %v222
    %v728 = vunpack.c.l.b16 %v223
    %v729 = vunpack.c.h.b16 %v223
    %v730 = vunpack.c.l.b16 %v224
    %v731 = vunpack.c.h.b16 %v224
    %v732 = vunpack.c.l.b16 %v225
    %v733 = vunpack.c.h.b16 %v225
    %v734 = vunpack.c.l.b16 %v226
    %v735 = vunpack.c.h.b16 %v226
    %v736 = vunpack.c.l.b16 %v227
    %v737 = vunpack.c.h.b16 %v227
    %v738 = vunpack.c.l.b16 %v228
    %v739 = vunpack.c.h.b16 %v228
    %v740 = vunpack.c.l.b16 %v229
    %v741 = vunpack.c.h.b16 %v229
    %v742 = vunpack.c.l.b16 %v230
    %v743 = vunpack.c.h.b16 %v230
    %v744 = vunpack.c.l.b16 %v231
    %v745 = vunpack.c.h.b16 %v231
    %v746 = vunpack.c.l.b16 %v232
    %v747 = vunpack.c.h.b16 %v232
    %v748 = vunpack.c.l.b16 %v233
    %v749 = vunpack.c.h.b16 %v233
    %v750 = vunpack.c.l.b16 %v234
    %v751 = vunpack.c.h.b16 %v234
    %v752 = vunpack.c.l.b16 %v235
    %v753 = vunpack.c.h.b16 %v235
    %v754 = vunpack.c.l.b16 %v236
    %v755 = vunpack.c.h.b16 %v236
    %v756 = vunpack.c.l.b16 %v237
    %v757 = vunpack.c.h.b16 %v237
    %v758 = vunpack.c.l.b16 %v238
    %v759 = vunpack.c.h.b16 %v238
    %v760 = vunpack.c.l.b16 %v239
    %v761 = vunpack.c.h.b16 %v239
    %v762 = vunpack.c.l.b16 %v240
    %v763 = vunpack.c.h.b16 %v240
    %v764 = vunpack.c.l.b16 %v241
    %v765 = vunpack.c.h.b16 %v241
    %v766 = vunpack.c.l.b16 %v242
    %v767 = vunpack.c.h.b16 %v242
    %v768 = vunpack.c.l.b16 %v243
    %v769 = vunpack.c.h.b16 %v243
    %v770 = vunpack.c.l.b16 %v244
    %v771 = vunpack.c.h.b16 %v244
    %v772 = vunpack.c.l.b16 %v245
    %v773 = vunpack.c.h.b16 %v245
    %v774 = vunpack.c.l.b16 %v246
    %v775 = vunpack.c.h.b16 %v246
    %v776 = vunpack.c.l.b16 %v247
    %v777 = vunpack.c.h.b16 %v247
    %v778 = vunpack.c.l.b16 %v248
    %v779 = vunpack.c.h.b16 %v248
    %v780 = vunpack.c.l.b16 %v249
    %v781 = vunpack.c.h.b16 %v249
    %v782 = vunpack.c.l.b16 %v250
    %v783 = vunpack.c.h.b16 %v250
    %v784 = vunpack.c.l.b16 %v251
    %v785 = vunpack.c.h.b16 %v251
    %v786 = vunpack.c.l.b16 %v252
    %v787 = vunpack.c.h.b16 %v252
    %v788 = vunpack.c.l.b16 %v253
    %v789 = vunpack.c.h.b16 %v253
    %v790 = vunpack.c.l.b16 %v254
    %v791 = vunpack.c.h.b16 %v254
    %v792 = vunpack.c.l.b16 %v255
    %v793 = vunpack.c.h.b16 %v255
    %v794 = vunpack.c.l.b16 %v256
    %v795 = vunpack.c.h.b16 %v256
    %v796 = vunpack.c.l.b16 %v257
    %v797 = vunpack.c.h.b16 %v257
    %v798 = vunpack.c.l.b16 %v258
    %v799 = vunpack.c.h.b16 %v258
    %v800 = vunpack.c.l.b16 %v259
    %v801 = vunpack.c.h.b16 %v259
    %v802 = vunpack.c.l.b16 %v260
    %v803 = vunpack.c.h.b16 %v260
    %v804 = vunpack.c.l.b16 %v261
    %v805 = vunpack.c.h.b16 %v261
    %v806 = vunpack.c.l.b16 %v262
    %v807 = vunpack.c.h.b16 %v262
    %v808 = vunpack.c.l.b16 %v263
    %v809 = vunpack.c.h.b16 %v263
    %v810 = vunpack.c.l.b16 %v264
    %v811 = vunpack.c.h.b16 %v264
    %v812 = vunpack.c.l.b16 %v265
    %v813 = vunpack.c.h.b16 %v265
    %v814 = vunpack.c.l.b16 %v266
    %v815 = vunpack.c.h.b16 %v266
    %v816 = vunpack.c.l.b16 %v267
    %v817 = vunpack.c.h.b16 %v267
    %v818 = vunpack.c.l.b16 %v268
    %v819 = vunpack.c.h.b16 %v268
    %v820 = vunpack.c.l.b16 %v269
    %v821 = vunpack.c.h.b16 %v269
    %v822 = vunpack.c.l.b16 %v270
    %v823 = vunpack.c.h.b16 %v270
    %v824 = vunpack.c.l.b16 %v271
    %v825 = vunpack.c.h.b16 %v271
    %v826 = vunpack.c.l.b16 %v272
    %v827 = vunpack.c.h.b16 %v272
    %v828 = vunpack.c.l.b16 %v273
    %v829 = vunpack.c.h.b16 %v273
    %v830 = vunpack.c.l.b16 %v274
    %v831 = vunpack.c.h.b16 %v274
    %v832 = vunpack.c.l.b16 %v275
    %v833 = vunpack.c.h.b16 %v275
    %v834 = vunpack.c.l.b16 %v276
    %v835 = vunpack.c.h.b16 %v276
    %v836 = vunpack.c.l.b16 %v277
    %v837 = vunpack.c.h.b16 %v277
    %v838 = vunpack.c.l.b16 %v278
    %v839 = vunpack.c.h.b16 %v278
    %v840 = vunpack.c.l.b16 %v279
    %v841 = vunpack.c.h.b16 %v279
    %v842 = vunpack.c.l.b16 %v280
    %v843 = vunpack.c.h.b16 %v280
    %v844 = vunpack.c.l.b16 %v281
    %v845 = vunpack.c.h.b16 %v281
    %v846 = vunpack.c.l.b16 %v282
    %v847 = vunpack.c.h.b16 %v282
    %v848 = vunpack.c.l.b16 %v283
    %v849 = vunpack.c.h.b16 %v283
    %v850 = vunpack.c.l.b16 %v284
    %v851 = vunpack.c.h.b16 %v284
    %v852 = vunpack.c.l.b16 %v285
    %v853 = vunpack.c.h.b16 %v285
    %v854 = vunpack.c.l.b16 %v286
    %v855 = vunpack.c.h.b16 %v286
    %v856 = vunpack.c.l.b16 %v287
    %v857 = vunpack.c.h.b16 %v287
    %v858 = vunpack.c.l.b16 %v288
    %v859 = vunpack.c.h.b16 %v288
    %v860 = vunpack.c.l.b16 %v289
    %v861 = vunpack.c.h.b16 %v289
    %v862 = vunpack.c.l.b16 %v290
    %v863 = vunpack.c.h.b16 %v290
    %v864 = vunpack.c.l.b16 %v291
    %v865 = vunpack.c.h.b16 %v291
    %v866 = vunpack.c.l.b16 %v292
    %v867 = vunpack.c.h.b16 %v292
    %v868 = vunpack.c.l.b16 %v293
    %v869 = vunpack.c.h.b16 %v293
    %v870 = vunpack.c.l.b16 %v294
    %v871 = vunpack.c.h.b16 %v294
    %v872 = vunpack.c.l.b16 %v295
    %v873 = vunpack.c.h.b16 %v295
    %v874 = vunpack.c.l.b16 %v296
    %v875 = vunpack.c.h.b16 %v296
    %v876 = vunpack.c.l.b16 %v297
    %v877 = vunpack.c.h.b16 %v297
    %v878 = vunpack.c.l.b16 %v298
    %v879 = vunpack.c.h.b16 %v298
    %v880 = vunpack.c.l.b16 %v299
    %v881 = vunpack.c.h.b16 %v299
    %v882 = vunpack.c.l.b16 %v300
    %v883 = vunpack.c.h.b16 %v300
    %v884 = vunpack.c.l.b16 %v301
    %v885 = vunpack.c.h.b16 %v301
    %v886 = vunpack.c.l.b16 %v302
    %v887 = vunpack.c.h.b16 %v302
    %v888 = vunpack.c.l.b16 %v303
    %v889 = vunpack.c.h.b16 %v303
    %v890 = vunpack.c.l.b16 %v304
    %v891 = vunpack.c.h.b16 %v304
    %v892 = vunpack.c.l.b16 %v305
    %v893 = vunpack.c.h.b16 %v305
    %v894 = vunpack.c.l.b16 %v306
    %v895 = vunpack.c.h.b16 %v306
    %v896 = vunpack.c.l.b16 %v307
    %v897 = vunpack.c.h.b16 %v307
    %v898 = vunpack.c.l.b16 %v308
    %v899 = vunpack.c.h.b16 %v308
    %v900 = vunpack.c.l.b16 %v309
    %v901 = vunpack.c.h.b16 %v309
    %v902 = vunpack.c.l.b16 %v310
    %v903 = vunpack.c.h.b16 %v310
    %v904 = vunpack.c.l.b16 %v311
    %v905 = vunpack.c.h.b16 %v311
    %v906 = vunpack.c.l.b16 %v312
    %v907 = vunpack.c.h.b16 %v312
    %v908 = vunpack.c.l.b16 %v313
    %v909 = vunpack.c.h.b16 %v313
    %v910 = vunpack.c.l.b16 %v314
    %v911 = vunpack.c.h.b16 %v314
    %v912 = vunpack.c.l.b16 %v315
    %v913 = vunpack.c.h.b16 %v315
    %v914 = vunpack.c.l.b16 %v316
    %v915 = vunpack.c.h.b16 %v316
    %v916 = vunpack.c.l.b16 %v317
    %v917 = vunpack.c.h.b16 %v317
    %v918 = vunpack.c.l.b16 %v318
    %v919 = vunpack.c.h.b16 %v318
    %v920 = vunpack.c.l.b16 %v319
    %v921 = vunpack.c.h.b16 %v319
    %v922 = vunpack.c.l.b16 %v320
    %v923 = vunpack.c.h.b16 %v320
    %v924 = vunpack.c.l.b16 %v321
    %v925 = vunpack.c.h.b16 %v321
    %v926 = vunpack.c.l.b16 %v322
    %v927 = vunpack.c.h.b16 %v322
    %v928 = vunpack.c.l.b16 %v323
    %v929 = vunpack.c.h.b16 %v323
    %v930 = vunpack.c.l.b16 %v324
    %v931 = vunpack.c.h.b16 %v324
    %v932 = vunpack.c.l.b16 %v325
    %v933 = vunpack.c.h.b16 %v325
    %v934 = vunpack.c.l.b16 %v326
    %v935 = vunpack.c.h.b16 %v326
    %v936 = vunpack.c.l.b16 %v327
    %v937 = vunpack.c.h.b16 %v327
    %v938 = vpack.c.b16 %v550, %v546
    %v939 = vpack.c.b16 %v551, %v547
    %v940 = vpack.c.b16 %v552, %v548
    %v941 = vpack.c.b16 %v553, %v549
    %v942 = vpack.c.b16 %v558, %v554
    %v943 = vpack.c.b16 %v559, %v555
    %v944 = vpack.c.b16 %v560, %v556
    %v945 = vpack.c.b16 %v561, %v557
    %v946 = vpack.c.b16 %v566, %v562
    %v947 = vpack.c.b16 %v567, %v563
    %v948 = vpack.c.b16 %v568, %v564
    %v949 = vpack.c.b16 %v569, %v565
    %v950 = vpack.c.b16 %v574, %v570
    %v951 = vpack.c.b16 %v575, %v571
    %v952 = vpack.c.b16 %v576, %v572
    %v953 = vpack.c.b16 %v577, %v573
    %v954 = vpack.c.b16 %v582, %v578
    %v955 = vpack.c.b16 %v583, %v579
    %v956 = vpack.c.b16 %v584, %v580
    %v957 = vpack.c.b16 %v585, %v581
    %v958 = vpack.c.b16 %v590, %v586
    %v959 = vpack.c.b16 %v591, %v587
    %v960 = vpack.c.b16 %v592, %v588
    %v961 = vpack.c.b16 %v593, %v589
    %v962 = vpack.c.b16 %v598, %v594
    %v963 = vpack.c.b16 %v599, %v595
    %v964 = vpack.c.b16 %v600, %v596
    %v965 = vpack.c.b16 %v601, %v597
    %v966 = vpack.c.b16 %v606, %v602
    %v967 = vpack.c.b16 %v607, %v603
    %v968 = vpack.c.b16 %v608, %v604
    %v969 = vpack.c.b16 %v609, %v605
    %v970 = vpack.c.b16 %v614, %v610
    %v971 = vpack.c.b16 %v615, %v611
    %v972 = vpack.c.b16 %v616, %v612
    %v973 = vpack.c.b16 %v617, %v613
    %v974 = vpack.c.b16 %v622, %v618
    %v975 = vpack.c.b16 %v623, %v619
    %v976 = vpack.c.b16 %v624, %v620
    %v977 = vpack.c.b16 %v625, %v621
    %v978 = vpack.c.b16 %v630, %v626
    %v979 = vpack.c.b16 %v631, %v627
    %v980 = vpack.c.b16 %v632, %v628
    %v981 = vpack.c.b16 %v633, %v629
    %v982 = vpack.c.b16 %v638, %v634
    %v983 = vpack.c.b16 %v639, %v635
    %v984 = vpack.c.b16 %v640, %v636
    %v985 = vpack.c.b16 %v641, %v637
    %v986 = vpack.c.b16 %v646, %v642
    %v987 = vpack.c.b16 %v647, %v643
    %v988 = vpack.c.b16 %v648, %v644
    %v989 = vpack.c.b16 %v649, %v645
    %v990 = vpack.c.b16 %v654, %v650
    %v991 = vpack.c.b16 %v655, %v651
    %v992 = vpack.c.b16 %v656, %v652
    %v993 = vpack.c.b16 %v657, %v653
    %v994 = vpack.c.b16 %v662, %v658
    %v995 = vpack.c.b16 %v663, %v659
    %v996 = vpack.c.b16 %v664, %v660
    %v997 = vpack.c.b16 %v665, %v661
    %v998 = vpack.c.b16 %v670, %v666
    %v999 = vpack.c.b16 %v671, %v667
    %v1000 = vpack.c.b16 %v672, %v668
    %v1001 = vpack.c.b16 %v673, %v669
    %v1002 = vpack.c.b16 %v678, %v674
    %v1003 = vpack.c.b16 %v679, %v675
    %v1004 = vpack.c.b16 %v680, %v676
    %v1005 = vpack.c.b16 %v681, %v677
    %v1006 = vpack.c.b16 %v686, %v682
    %v1007 = vpack.c.b16 %v687, %v683
    %v1008 = vpack.c.b16 %v688, %v684
    %v1009 = vpack.c.b16 %v689, %v685
    %v1010 = vpack.c.b16 %v694, %v690
    %v1011 = vpack.c.b16 %v695, %v691
    %v1012 = vpack.c.b16 %v696, %v692
    %v1013 = vpack.c.b16 %v697, %v693
    %v1014 = vpack.c.b16 %v702, %v698
    %v1015 = vpack.c.b16 %v703, %v699
    %v1016 = vpack.c.b16 %v704, %v700
    %v1017 = vpack.c.b16 %v705, %v701
    %v1018 = vpack.c.b16 %v710, %v706
    %v1019 = vpack.c.b16 %v711, %v707
    %v1020 = vpack.c.b16 %v712, %v708
    %v1021 = vpack.c.b16 %v713, %v709
    %v1022 = vpack.c.b16 %v718, %v714
    %v1023 = vpack.c.b16 %v719, %v715
    %v1024 = vpack.c.b16 %v720, %v716
    %v1025 = vpack.c.b16 %v721, %v717
    %v1026 = vpack.c.b16 %v726, %v722
    %v1027 = vpack.c.b16 %v727, %v723
    %v1028 = vpack.c.b16 %v728, %v724
    %v1029 = vpack.c.b16 %v729, %v725
    %v1030 = vpack.c.b16 %v734, %v730
    %v1031 = vpack.c.b16 %v735, %v731
    %v1032 = vpack.c.b16 %v736, %v732
    %v1033 = vpack.c.b16 %v737, %v733
    %v1034 = vpack.c.b16 %v742, %v738
    %v1035 = vpack.c.b16 %v743, %v739
    %v1036 = vpack.c.b16 %v744, %v740
    %v1037 = vpack.c.b16 %v745, %v741
    %v1038 = vpack.c.b16 %v750, %v746
    %v1039 = vpack.c.b16 %v751, %v747
    %v1040 = vpack.c.b16 %v752, %v748
    %v1041 = vpack.c.b16 %v753, %v749
    %v1042 = vpack.c.b16 %v758, %v754
    %v1043 = vpack.c.b16 %v759, %v755
    %v1044 = vpack.c.b16 %v760, %v756
    %v1045 = vpack.c.b16 %v761, %v757
    %v1046 = vpack.c.b16 %v766, %v762
    %v1047 = vpack.c.b16 %v767, %v763
    %v1048 = vpack.c.b16 %v768, %v764
    %v1049 = vpack.c.b16 %v769, %v765
    %v1050 = vpack.c.b16 %v774, %v770
    %v1051 = vpack.c.b16 %v775, %v771
    %v1052 = vpack.c.b16 %v776, %v772
    %v1053 = vpack.c.b16 %v777, %v773
    %v1054 = vpack.c.b16 %v782, %v778
    %v1055 = vpack.c.b16 %v783, %v779
    %v1056 = vpack.c.b16 %v784, %v780
    %v1057 = vpack.c.b16 %v785, %v781
    %v1058 = vpack.c.b16 %v790, %v786
    %v1059 = vpack.c.b16 %v791, %v787
    %v1060 = vpack.c.b16 %v792, %v788
    %v1061 = vpack.c.b16 %v793, %v789
    %v1062 = vpack.c.b16 %v798, %v794
    %v1063 = vpack.c.b16 %v799, %v795
    %v1064 = vpack.c.b16 %v800, %v796
    %v1065 = vpack.c.b16 %v801, %v797
    %v1066 = vpack.c.b16 %v806, %v802
    %v1067 = vpack.c.b16 %v807, %v803
    %v1068 = vpack.c.b16 %v808, %v804
    %v1069 = vpack.c.b16 %v809, %v805
    %v1070 = vpack.c.b16 %v814, %v810
    %v1071 = vpack.c.b16 %v815, %v811
    %v1072 = vpack.c.b16 %v816, %v812
    %v1073 = vpack.c.b16 %v817, %v813
    %v1074 = vpack.c.b16 %v822, %v818
    %v1075 = vpack.c.b16 %v823, %v819
    %v1076 = vpack.c.b16 %v824, %v820
    %v1077 = vpack.c.b16 %v825, %v821
    %v1078 = vpack.c.b16 %v830, %v826
    %v1079 = vpack.c.b16 %v831, %v827
    %v1080 = vpack.c.b16 %v832, %v828
    %v1081 = vpack.c.b16 %v833, %v829
    %v1082 = vpack.c.b16 %v838, %v834
    %v1083 = vpack.c.b16 %v839, %v835
    %v1084 = vpack.c.b16 %v840, %v836
    %v1085 = vpack.c.b16 %v841, %v837
    %v1086 = vpack.c.b16 %v846, %v842
    %v1087 = vpack.c.b16 %v847, %v843
    %v1088 = vpack.c.b16 %v848, %v844
    %v1089 = vpack.c.b16 %v849, %v845
    %v1090 = vpack.c.b16 %v854, %v850
    %v1091 = vpack.c.b16 %v855, %v851
    %v1092 = vpack.c.b16 %v856, %v852
    %v1093 = vpack.c.b16 %v857, %v853
    %v1094 = vpack.c.b16 %v862, %v858
    %v1095 = vpack.c.b16 %v863, %v859
    %v1096 = vpack.c.b16 %v864, %v860
    %v1097 = vpack.c.b16 %v865, %v861
    %v1098 = vpack.c.b16 %v870, %v866
    %v1099 = vpack.c.b16 %v871, %v867
    %v1100 = vpack.c.b16 %v872, %v868
    %v1101 = vpack.c.b16 %v873, %v869
    %v1102 = vpack.c.b16 %v878, %v874
    %v1103 = vpack.c.b16 %v879, %v875
    %v1104 = vpack.c.b16 %v880, %v876
    %v1105 = vpack.c.b16 %v881, %v877
    %v1106 = vpack.c.b16 %v886, %v882
    %v1107 = vpack.c.b16 %v887, %v883
    %v1108 = vpack.c.b16 %v888, %v884
    %v1109 = vpack.c.b16 %v889, %v885
    %v1110 = vpack.c.b16 %v894, %v890
    %v1111 = vpack.c.b16 %v895, %v891
    %v1112 = vpack.c.b16 %v896, %v892
    %v1113 = vpack.c.b16 %v897, %v893
    %v1114 = vpack.c.b16 %v902, %v898
    %v1115 = vpack.c.b16 %v903, %v899
    %v1116 = vpack.c.b16 %v904, %v900
    %v1117 = vpack.c.b16 %v905, %v901
    %v1118 = vpack.c.b16 %v910, %v906
    %v1119 = vpack.c.b16 %v911, %v907
    %v1120 = vpack.c.b16 %v912, %v908
    %v1121 = vpack.c.b16 %v913, %v909
    %v1122 = vpack.c.b16 %v918, %v914
    %v1123 = vpack.c.b16 %v919, %v915
    %v1124 = vpack.c.b16 %v920, %v916
    %v1125 = vpack.c.b16 %v921, %v917
    %v1126 = vpack.c.b16 %v926, %v922
    %v1127 = vpack.c.b16 %v927, %v923
    %v1128 = vpack.c.b16 %v928, %v924
    %v1129 = vpack.c.b16 %v929, %v925
    %v1130 = vpack.c.b16 %v934, %v930
    %v1131 = vpack.c.b16 %v935, %v931
    %v1132 = vpack.c.b16 %v936, %v932
    %v1133 = vpack.c.b16 %v937, %v933
    %vm1330 = vcmask 130048
    %v1332 = vsel %vm1330, %v131, 0
    %1334 = vmatprep.subr.bf16.mxu0 %v939
    %1335 = vmatpush1.bf16.msra.mxu0 %v938
    %1336 = vmatprep.subr.bf16.mxu0 %v943
    %1337 = vmatpush1.bf16.msra.mxu0 %v942
    %1338 = vmatprep.subr.bf16.mxu0 %v947
    %1339 = vmatpush1.bf16.msra.mxu0 %v946
    %1340 = vmatprep.subr.bf16.mxu0 %v951
    %1341 = vmatpush1.bf16.msra.mxu0 %v950
    %1342 = vmatprep.subr.bf16.mxu0 %v955
    %1343 = vmatpush1.bf16.msra.mxu0 %v954
    %1344 = vmatprep.subr.bf16.mxu0 %v959
    %1345 = vmatpush1.bf16.msra.mxu0 %v958
    %1346 = vmatprep.subr.bf16.mxu0 %v963
    %1347 = vmatpush1.bf16.msra.mxu0 %v962
    %1348 = vmatprep.subr.bf16.mxu0 %v967
    %1349 = vmatpush1.bf16.msra.mxu0 %v966
    %1350 = vmatprep.subr.bf16.mxu0 %v971
    %1351 = vmatpush1.bf16.msra.mxu0 %v970
    %1352 = vmatprep.subr.bf16.mxu0 %v975
    %1353 = vmatpush1.bf16.msra.mxu0 %v974
    %1354 = vmatprep.subr.bf16.mxu0 %v979
    %1355 = vmatpush1.bf16.msra.mxu0 %v978
    %1356 = vmatprep.subr.bf16.mxu0 %v983
    %1357 = vmatpush1.bf16.msra.mxu0 %v982
    %1358 = vmatprep.subr.bf16.mxu0 %v987
    %1359 = vmatpush1.bf16.msra.mxu0 %v986
    %1360 = vmatprep.subr.bf16.mxu0 %v991
    %1361 = vmatpush1.bf16.msra.mxu0 %v990
    %1362 = vmatprep.subr.bf16.mxu0 %v995
    %1363 = vmatpush1.bf16.msra.mxu0 %v994
    %1364 = vmatprep.subr.bf16.mxu0 %v999
    %1365 = vmatpush1.bf16.msra.mxu0 %v998
    %1366 = vmatprep.mubr.bf16.mxu0 %v126
    %1367 = vmatmul.mubr.bf16.gmra.mrb[0].mxu0 %v125
    %v1368 = vpop.f32.mrb[0].mxu0
    %v1369 = vadd.f32 %v333, %v1368
    %v1370 = vpop.f32.mrb[0].mxu0
    %v1371 = vadd.f32 %v337, %v1370
    %v1372 = vpop.f32.mrb[0].mxu0
    %v1373 = vpop.f32.mrb[0].mxu0
    %1374 = vdwg.mxu0
    %1375 = vmatprep.subr.bf16.mxu0 %v1003
    %1376 = vmatpush1.bf16.msra.mxu0 %v1002
    %1377 = vmatprep.subr.bf16.mxu0 %v1007
    %1378 = vmatpush1.bf16.msra.mxu0 %v1006
    %1379 = vmatprep.subr.bf16.mxu0 %v1011
    %1380 = vmatpush1.bf16.msra.mxu0 %v1010
    %1381 = vmatprep.subr.bf16.mxu0 %v1015
    %1382 = vmatpush1.bf16.msra.mxu0 %v1014
    %1383 = vmatprep.subr.bf16.mxu0 %v1019
    %1384 = vmatpush1.bf16.msra.mxu0 %v1018
    %1385 = vmatprep.subr.bf16.mxu0 %v1023
    %1386 = vmatpush1.bf16.msra.mxu0 %v1022
    %1387 = vmatprep.subr.bf16.mxu0 %v1027
    %1388 = vmatpush1.bf16.msra.mxu0 %v1026
    %1389 = vmatprep.subr.bf16.mxu0 %v1031
    %1390 = vmatpush1.bf16.msra.mxu0 %v1030
    %1391 = vmatprep.subr.bf16.mxu0 %v1035
    %1392 = vmatpush1.bf16.msra.mxu0 %v1034
    %1393 = vmatprep.subr.bf16.mxu0 %v1039
    %1394 = vmatpush1.bf16.msra.mxu0 %v1038
    %1395 = vmatprep.subr.bf16.mxu0 %v1043
    %1396 = vmatpush1.bf16.msra.mxu0 %v1042
    %1397 = vmatprep.subr.bf16.mxu0 %v1047
    %1398 = vmatpush1.bf16.msra.mxu0 %v1046
    %1399 = vmatprep.subr.bf16.mxu0 %v1051
    %1400 = vmatpush1.bf16.msra.mxu0 %v1050
    %1401 = vmatprep.subr.bf16.mxu0 %v1055
    %1402 = vmatpush1.bf16.msra.mxu0 %v1054
    %1403 = vmatprep.subr.bf16.mxu0 %v1059
    %1404 = vmatpush1.bf16.msra.mxu0 %v1058
    %1405 = vmatprep.subr.bf16.mxu0 %v1063
    %1406 = vmatpush1.bf16.msra.mxu0 %v1062
    %1407 = vmatprep.mubr.bf16.mxu0 %v128
    %1408 = vmatmul.mubr.bf16.gmra.mrb[0].mxu0 %v127
    %v1409 = vpop.f32.mrb[0].mxu0
    %v1410 = vadd.f32 %v1369, %v1409
    %v1411 = vpop.f32.mrb[0].mxu0
    %v1412 = vadd.f32 %v1371, %v1411
    %v1413 = vpop.f32.mrb[0].mxu0
    %v1414 = vpop.f32.mrb[0].mxu0
    %1415 = vdwg.mxu0
    %1416 = vmatprep.subr.bf16.mxu0 %v1067
    %1417 = vmatpush1.bf16.msra.mxu0 %v1066
    %1418 = vmatprep.subr.bf16.mxu0 %v1071
    %1419 = vmatpush1.bf16.msra.mxu0 %v1070
    %1420 = vmatprep.subr.bf16.mxu0 %v1075
    %1421 = vmatpush1.bf16.msra.mxu0 %v1074
    %1422 = vmatprep.subr.bf16.mxu0 %v1079
    %1423 = vmatpush1.bf16.msra.mxu0 %v1078
    %1424 = vmatprep.subr.bf16.mxu0 %v1083
    %1425 = vmatpush1.bf16.msra.mxu0 %v1082
    %1426 = vmatprep.subr.bf16.mxu0 %v1087
    %1427 = vmatpush1.bf16.msra.mxu0 %v1086
    %1428 = vmatprep.subr.bf16.mxu0 %v1091
    %1429 = vmatpush1.bf16.msra.mxu0 %v1090
    %1430 = vmatprep.subr.bf16.mxu0 %v1095
    %1431 = vmatpush1.bf16.msra.mxu0 %v1094
    %1432 = vmatprep.subr.bf16.mxu0 %v1099
    %1433 = vmatpush1.bf16.msra.mxu0 %v1098
    %1434 = vmatprep.subr.bf16.mxu0 %v1103
    %1435 = vmatpush1.bf16.msra.mxu0 %v1102
    %1436 = vmatprep.subr.bf16.mxu0 %v1107
    %1437 = vmatpush1.bf16.msra.mxu0 %v1106
    %1438 = vmatprep.subr.bf16.mxu0 %v1111
    %1439 = vmatpush1.bf16.msra.mxu0 %v1110
    %1440 = vmatprep.subr.bf16.mxu0 %v1115
    %1441 = vmatpush1.bf16.msra.mxu0 %v1114
    %1442 = vmatprep.subr.bf16.mxu0 %v1119
    %1443 = vmatpush1.bf16.msra.mxu0 %v1118
    %1444 = vmatprep.subr.bf16.mxu0 %v1123
    %1445 = vmatpush1.bf16.msra.mxu0 %v1122
    %1446 = vmatprep.subr.bf16.mxu0 %v1127
    %1447 = vmatpush1.bf16.msra.mxu0 %v1126
    %1448 = vmatprep.mubr.bf16.mxu0 %v130
    %1449 = vmatmul.mubr.bf16.gmra.mrb[0].mxu0 %v129
    %v1450 = vpop.f32.mrb[0].mxu0
    %v1451 = vadd.f32 %v1410, %v1450
    %v1452 = vpop.f32.mrb[0].mxu0
    %v1453 = vadd.f32 %v1412, %v1452
    %v1454 = vpop.f32.mrb[0].mxu0
    %v1455 = vpop.f32.mrb[0].mxu0
    %1456 = vdwg.mxu0
    %1457 = vmatprep.subr.bf16.mxu0 %v1131
    %1458 = vmatpush1.bf16.msra.mxu0 %v1130
    %1459 = vmatprep.subr.bf16.mxu0 0
    %1460 = vmatpush1.bf16.msra.mxu0 0
    %1461 = vmatprep.subr.bf16.mxu0 0
    %1462 = vmatpush1.bf16.msra.mxu0 0
    %1463 = vmatprep.subr.bf16.mxu0 0
    %1464 = vmatpush1.bf16.msra.mxu0 0
    %1465 = vmatprep.subr.bf16.mxu0 0
    %1466 = vmatpush1.bf16.msra.mxu0 0
    %1467 = vmatprep.subr.bf16.mxu0 0
    %1468 = vmatpush1.bf16.msra.mxu0 0
    %1469 = vmatprep.subr.bf16.mxu0 0
    %1470 = vmatpush1.bf16.msra.mxu0 0
    %1471 = vmatprep.subr.bf16.mxu0 0
    %1472 = vmatpush1.bf16.msra.mxu0 0
    %1473 = vmatprep.subr.bf16.mxu0 0
    %1474 = vmatpush1.bf16.msra.mxu0 0
    %1475 = vmatprep.subr.bf16.mxu0 0
    %1476 = vmatpush1.bf16.msra.mxu0 0
    %1477 = vmatprep.subr.bf16.mxu0 0
    %1478 = vmatpush1.bf16.msra.mxu0 0
    %1479 = vmatprep.subr.bf16.mxu0 0
    %1480 = vmatpush1.bf16.msra.mxu0 0
    %1481 = vmatprep.subr.bf16.mxu0 0
    %1482 = vmatpush1.bf16.msra.mxu0 0
    %1483 = vmatprep.subr.bf16.mxu0 0
    %1484 = vmatpush1.bf16.msra.mxu0 0
    %1485 = vmatprep.subr.bf16.mxu0 0
    %1486 = vmatpush1.bf16.msra.mxu0 0
    %1487 = vmatprep.subr.bf16.mxu0 0
    %1488 = vmatpush1.bf16.msra.mxu0 0
    %1489 = vmatprep.mubr.bf16.mxu0 0
    %1490 = vmatmul.mubr.bf16.gmra.mrb[0].mxu0 %v1332
    %v1491 = vpop.f32.mrb[0].mxu0
    %v1492 = vadd.f32 %v1451, %v1491
    %v1493 = vpop.f32.mrb[0].mxu0
    %v1494 = vadd.f32 %v1453, %v1493
    %v1495 = vpop.f32.mrb[0].mxu0
    %v1496 = vpop.f32.mrb[0].mxu0
    %1497 = vdwg.mxu0
    %1498 = vmatprep.subr.bf16.mxu0 %v941
    %1499 = vmatpush1.bf16.msra.mxu0 %v940
    %1500 = vmatprep.subr.bf16.mxu0 %v945
    %1501 = vmatpush1.bf16.msra.mxu0 %v944
    %1502 = vmatprep.subr.bf16.mxu0 %v949
    %1503 = vmatpush1.bf16.msra.mxu0 %v948
    %1504 = vmatprep.subr.bf16.mxu0 %v953
    %1505 = vmatpush1.bf16.msra.mxu0 %v952
    %1506 = vmatprep.subr.bf16.mxu0 %v957
    %1507 = vmatpush1.bf16.msra.mxu0 %v956
    %1508 = vmatprep.subr.bf16.mxu0 %v961
    %1509 = vmatpush1.bf16.msra.mxu0 %v960
    %1510 = vmatprep.subr.bf16.mxu0 %v965
    %1511 = vmatpush1.bf16.msra.mxu0 %v964
    %1512 = vmatprep.subr.bf16.mxu0 %v969
    %1513 = vmatpush1.bf16.msra.mxu0 %v968
    %1514 = vmatprep.subr.bf16.mxu0 %v973
    %1515 = vmatpush1.bf16.msra.mxu0 %v972
    %1516 = vmatprep.subr.bf16.mxu0 %v977
    %1517 = vmatpush1.bf16.msra.mxu0 %v976
    %1518 = vmatprep.subr.bf16.mxu0 %v981
    %1519 = vmatpush1.bf16.msra.mxu0 %v980
    %1520 = vmatprep.subr.bf16.mxu0 %v985
    %1521 = vmatpush1.bf16.msra.mxu0 %v984
    %1522 = vmatprep.subr.bf16.mxu0 %v989
    %1523 = vmatpush1.bf16.msra.mxu0 %v988
    %1524 = vmatprep.subr.bf16.mxu0 %v993
    %1525 = vmatpush1.bf16.msra.mxu0 %v992
    %1526 = vmatprep.subr.bf16.mxu0 %v997
    %1527 = vmatpush1.bf16.msra.mxu0 %v996
    %1528 = vmatprep.subr.bf16.mxu0 %v1001
    %1529 = vmatpush1.bf16.msra.mxu0 %v1000
    %1530 = vmatprep.mubr.bf16.mxu0 %v126
    %1531 = vmatmul.mubr.bf16.gmra.mrb[0].mxu0 %v125
    %v1532 = vpop.f32.mrb[0].mxu0
    %v1533 = vadd.f32 %v341, %v1532
    %v1534 = vpop.f32.mrb[0].mxu0
    %v1535 = vadd.f32 %v345, %v1534
    %v1536 = vpop.f32.mrb[0].mxu0
    %v1537 = vpop.f32.mrb[0].mxu0
    %1538 = vdwg.mxu0
    %1539 = vmatprep.subr.bf16.mxu0 %v1005
    %1540 = vmatpush1.bf16.msra.mxu0 %v1004
    %1541 = vmatprep.subr.bf16.mxu0 %v1009
    %1542 = vmatpush1.bf16.msra.mxu0 %v1008
    %1543 = vmatprep.subr.bf16.mxu0 %v1013
    %1544 = vmatpush1.bf16.msra.mxu0 %v1012
    %1545 = vmatprep.subr.bf16.mxu0 %v1017
    %1546 = vmatpush1.bf16.msra.mxu0 %v1016
    %1547 = vmatprep.subr.bf16.mxu0 %v1021
    %1548 = vmatpush1.bf16.msra.mxu0 %v1020
    %1549 = vmatprep.subr.bf16.mxu0 %v1025
    %1550 = vmatpush1.bf16.msra.mxu0 %v1024
    %1551 = vmatprep.subr.bf16.mxu0 %v1029
    %1552 = vmatpush1.bf16.msra.mxu0 %v1028
    %1553 = vmatprep.subr.bf16.mxu0 %v1033
    %1554 = vmatpush1.bf16.msra.mxu0 %v1032
    %1555 = vmatprep.subr.bf16.mxu0 %v1037
    %1556 = vmatpush1.bf16.msra.mxu0 %v1036
    %1557 = vmatprep.subr.bf16.mxu0 %v1041
    %1558 = vmatpush1.bf16.msra.mxu0 %v1040
    %1559 = vmatprep.subr.bf16.mxu0 %v1045
    %1560 = vmatpush1.bf16.msra.mxu0 %v1044
    %1561 = vmatprep.subr.bf16.mxu0 %v1049
    %1562 = vmatpush1.bf16.msra.mxu0 %v1048
    %1563 = vmatprep.subr.bf16.mxu0 %v1053
    %1564 = vmatpush1.bf16.msra.mxu0 %v1052
    %1565 = vmatprep.subr.bf16.mxu0 %v1057
    %1566 = vmatpush1.bf16.msra.mxu0 %v1056
    %1567 = vmatprep.subr.bf16.mxu0 %v1061
    %1568 = vmatpush1.bf16.msra.mxu0 %v1060
    %1569 = vmatprep.subr.bf16.mxu0 %v1065
    %1570 = vmatpush1.bf16.msra.mxu0 %v1064
    %1571 = vmatprep.mubr.bf16.mxu0 %v128
    %1572 = vmatmul.mubr.bf16.gmra.mrb[0].mxu0 %v127
    %v1573 = vpop.f32.mrb[0].mxu0
    %v1574 = vadd.f32 %v1533, %v1573
    %v1575 = vpop.f32.mrb[0].mxu0
    %v1576 = vadd.f32 %v1535, %v1575
    %v1577 = vpop.f32.mrb[0].mxu0
    %v1578 = vpop.f32.mrb[0].mxu0
    %1579 = vdwg.mxu0
    %1580 = vmatprep.subr.bf16.mxu0 %v1069
    %1581 = vmatpush1.bf16.msra.mxu0 %v1068
    %1582 = vmatprep.subr.bf16.mxu0 %v1073
    %1583 = vmatpush1.bf16.msra.mxu0 %v1072
    %1584 = vmatprep.subr.bf16.mxu0 %v1077
    %1585 = vmatpush1.bf16.msra.mxu0 %v1076
    %1586 = vmatprep.subr.bf16.mxu0 %v1081
    %1587 = vmatpush1.bf16.msra.mxu0 %v1080
    %1588 = vmatprep.subr.bf16.mxu0 %v1085
    %1589 = vmatpush1.bf16.msra.mxu0 %v1084
    %1590 = vmatprep.subr.bf16.mxu0 %v1089
    %1591 = vmatpush1.bf16.msra.mxu0 %v1088
    %1592 = vmatprep.subr.bf16.mxu0 %v1093
    %1593 = vmatpush1.bf16.msra.mxu0 %v1092
    %1594 = vmatprep.subr.bf16.mxu0 %v1097
    %1595 = vmatpush1.bf16.msra.mxu0 %v1096
    %1596 = vmatprep.subr.bf16.mxu0 %v1101
    %1597 = vmatpush1.bf16.msra.mxu0 %v1100
    %1598 = vmatprep.subr.bf16.mxu0 %v1105
    %1599 = vmatpush1.bf16.msra.mxu0 %v1104
    %1600 = vmatprep.subr.bf16.mxu0 %v1109
    %1601 = vmatpush1.bf16.msra.mxu0 %v1108
    %1602 = vmatprep.subr.bf16.mxu0 %v1113
    %1603 = vmatpush1.bf16.msra.mxu0 %v1112
    %1604 = vmatprep.subr.bf16.mxu0 %v1117
    %1605 = vmatpush1.bf16.msra.mxu0 %v1116
    %1606 = vmatprep.subr.bf16.mxu0 %v1121
    %1607 = vmatpush1.bf16.msra.mxu0 %v1120
    %1608 = vmatprep.subr.bf16.mxu0 %v1125
    %1609 = vmatpush1.bf16.msra.mxu0 %v1124
    %1610 = vmatprep.subr.bf16.mxu0 %v1129
    %1611 = vmatpush1.bf16.msra.mxu0 %v1128
    %1612 = vmatprep.mubr.bf16.mxu0 %v130
    %1613 = vmatmul.mubr.bf16.gmra.mrb[0].mxu0 %v129
    %v1614 = vpop.f32.mrb[0].mxu0
    %v1615 = vadd.f32 %v1574, %v1614
    %v1616 = vpop.f32.mrb[0].mxu0
    %v1617 = vadd.f32 %v1576, %v1616
    %v1618 = vpop.f32.mrb[0].mxu0
    %v1619 = vpop.f32.mrb[0].mxu0
    %1620 = vdwg.mxu0
    %1621 = vmatprep.subr.bf16.mxu0 %v1133
    %1622 = vmatpush1.bf16.msra.mxu0 %v1132
    %1623 = vmatprep.subr.bf16.mxu0 0
    %1624 = vmatpush1.bf16.msra.mxu0 0
    %1625 = vmatprep.subr.bf16.mxu0 0
    %1626 = vmatpush1.bf16.msra.mxu0 0
    %1627 = vmatprep.subr.bf16.mxu0 0
    %1628 = vmatpush1.bf16.msra.mxu0 0
    %1629 = vmatprep.subr.bf16.mxu0 0
    %1630 = vmatpush1.bf16.msra.mxu0 0
    %1631 = vmatprep.subr.bf16.mxu0 0
    %1632 = vmatpush1.bf16.msra.mxu0 0
    %1633 = vmatprep.subr.bf16.mxu0 0
    %1634 = vmatpush1.bf16.msra.mxu0 0
    %1635 = vmatprep.subr.bf16.mxu0 0
    %1636 = vmatpush1.bf16.msra.mxu0 0
    %1637 = vmatprep.subr.bf16.mxu0 0
    %1638 = vmatpush1.bf16.msra.mxu0 0
    %1639 = vmatprep.subr.bf16.mxu0 0
    %1640 = vmatpush1.bf16.msra.mxu0 0
    %1641 = vmatprep.subr.bf16.mxu0 0
    %1642 = vmatpush1.bf16.msra.mxu0 0
    %1643 = vmatprep.subr.bf16.mxu0 0
    %1644 = vmatpush1.bf16.msra.mxu0 0
    %1645 = vmatprep.subr.bf16.mxu0 0
    %1646 = vmatpush1.bf16.msra.mxu0 0
    %1647 = vmatprep.subr.bf16.mxu0 0
    %1648 = vmatpush1.bf16.msra.mxu0 0
    %1649 = vmatprep.subr.bf16.mxu0 0
    %1650 = vmatpush1.bf16.msra.mxu0 0
    %1651 = vmatprep.subr.bf16.mxu0 0
    %1652 = vmatpush1.bf16.msra.mxu0 0
    %1653 = vmatprep.mubr.bf16.mxu0 0
    %1654 = vmatmul.mubr.bf16.gmra.mrb[0].mxu0 %v1332
    %v1655 = vpop.f32.mrb[0].mxu0
    %v1656 = vadd.f32 %v1615, %v1655
    %v1657 = vpop.f32.mrb[0].mxu0
    %v1658 = vadd.f32 %v1617, %v1657
    %v1659 = vpop.f32.mrb[0].mxu0
    %v1660 = vpop.f32.mrb[0].mxu0
    %1661 = vdwg.mxu0
    %v1662 = vmax.f32 %v1492, 0.0
    %v1663 = vmax.f32 %v1494, 0.0
    %v1664 = vmax.f32 %v1656, 0.0
    %v1665 = vmax.f32 %v1658, 0.0
    %v1666 = vpack.c.bf16 %v1662, %v1662
    %v1667 = vpack.c.bf16 %v1663, %v1663
    %v1668 = vpack.c.bf16 %v1664, %v1664
    %v1669 = vpack.c.bf16 %v1665, %v1665
    %v1670 = vld [vmem:[#allocation7] sm:$0xff]
    %v1671 = vld [vmem:[#allocation7 + $0x8] sm:$0xff]
    %v1672 = vld [vmem:[#allocation7 + $0x10] sm:$0xff]
    %v1673 = vld [vmem:[#allocation7 + $0x18] sm:$0xff]
    %v1674 = vld [vmem:[#allocation7 + $0x20] sm:$0xff]
    %v1675 = vld [vmem:[#allocation7 + $0x28] sm:$0xff]
    %v1676 = vld [vmem:[#allocation7 + $0x30] sm:$0xff]
    %v1677 = vld [vmem:[#allocation7 + $0x38] sm:$0xff]
    %v1678 = vld [vmem:[#allocation7 + $0x40] sm:$0xff]
    %v1679 = vld [vmem:[#allocation7 + $0x48] sm:$0xff]
    %v1680 = vld [vmem:[#allocation7 + $0x50] sm:$0xff]
    %v1681 = vld [vmem:[#allocation7 + $0x58] sm:$0xff]
    %v1682 = vld [vmem:[#allocation7 + $0x60] sm:$0xff]
    %v1683 = vld [vmem:[#allocation7 + $0x68] sm:$0xff]
    %v1684 = vld [vmem:[#allocation7 + $0x70] sm:$0xff]
    %v1685 = vld [vmem:[#allocation7 + $0x78] sm:$0xff]
    %v1686 = vld [vmem:[#allocation7 + $0x80] sm:$0xff]
    %v1687 = vld [vmem:[#allocation7 + $0x88] sm:$0xff]
    %v1688 = vld [vmem:[#allocation7 + $0x90] sm:$0xff]
    %v1689 = vld [vmem:[#allocation7 + $0x98] sm:$0xff]
    %v1690 = vld [vmem:[#allocation7 + $0xa0] sm:$0xff]
    %v1691 = vld [vmem:[#allocation7 + $0xa8] sm:$0xff]
    %v1692 = vld [vmem:[#allocation7 + $0xb0] sm:$0xff]
    %v1693 = vld [vmem:[#allocation7 + $0xb8] sm:$0xff]
    %v1694 = vld [vmem:[#allocation7 + $0xc0] sm:$0xff]
    %v1695 = vld [vmem:[#allocation7 + $0xc8] sm:$0xff]
    %v1696 = vld [vmem:[#allocation7 + $0xd0] sm:$0xff]
    %v1697 = vld [vmem:[#allocation7 + $0xd8] sm:$0xff]
    %v1698 = vld [vmem:[#allocation7 + $0xe0] sm:$0xff]
    %v1699 = vld [vmem:[#allocation7 + $0xe8] sm:$0xff]
    %v1700 = vld [vmem:[#allocation7 + $0xf0] sm:$0xff]
    %v1701 = vld [vmem:[#allocation7 + $0xf8] sm:$0xff]
    %v1702 = vld [vmem:[#allocation7 + $0x100] sm:$0xff]
    %v1703 = vld [vmem:[#allocation7 + $0x108] sm:$0xff]
    %v1704 = vld [vmem:[#allocation7 + $0x110] sm:$0xff]
    %v1705 = vld [vmem:[#allocation7 + $0x118] sm:$0xff]
    %v1706 = vld [vmem:[#allocation7 + $0x120] sm:$0xff]
    %v1707 = vld [vmem:[#allocation7 + $0x128] sm:$0xff]
    %v1708 = vld [vmem:[#allocation7 + $0x130] sm:$0xff]
    %v1709 = vld [vmem:[#allocation7 + $0x138] sm:$0xff]
    %v1710 = vld [vmem:[#allocation7 + $0x140] sm:$0xff]
    %v1711 = vld [vmem:[#allocation7 + $0x148] sm:$0xff]
    %v1712 = vld [vmem:[#allocation7 + $0x150] sm:$0xff]
    %v1713 = vld [vmem:[#allocation7 + $0x158] sm:$0xff]
    %v1714 = vld [vmem:[#allocation7 + $0x160] sm:$0xff]
    %v1715 = vld [vmem:[#allocation7 + $0x168] sm:$0xff]
    %v1716 = vld [vmem:[#allocation7 + $0x170] sm:$0xff]
    %v1717 = vld [vmem:[#allocation7 + $0x178] sm:$0xff]
    %v1718 = vld [vmem:[#allocation7 + $0x180] sm:$0xff]
    %v1719 = vld [vmem:[#allocation7 + $0x188] sm:$0xff]
    %v1720 = vld [vmem:[#allocation7 + $0x190] sm:$0xff]
    %v1721 = vld [vmem:[#allocation7 + $0x198] sm:$0xff]
    %v1722 = vld [vmem:[#allocation7 + $0x1a0] sm:$0xff]
    %v1723 = vld [vmem:[#allocation7 + $0x1a8] sm:$0xff]
    %v1724 = vld [vmem:[#allocation7 + $0x1b0] sm:$0xff]
    %v1725 = vld [vmem:[#allocation7 + $0x1b8] sm:$0xff]
    %v1726 = vld [vmem:[#allocation7 + $0x1c0] sm:$0xff]
    %v1727 = vld [vmem:[#allocation7 + $0x1c8] sm:$0xff]
    %v1728 = vld [vmem:[#allocation7 + $0x1d0] sm:$0xff]
    %v1729 = vld [vmem:[#allocation7 + $0x1d8] sm:$0xff]
    %v1730 = vld [vmem:[#allocation7 + $0x1e0] sm:$0xff]
    %v1731 = vld [vmem:[#allocation7 + $0x1e8] sm:$0xff]
    %v1732 = vld [vmem:[#allocation7 + $0x1f0] sm:$0xff]
    %v1733 = vld [vmem:[#allocation7 + $0x1f8] sm:$0xff]
    %v1734 = vld [vmem:[#allocation7 + $0x200] sm:$0xff]
    %v1735 = vld [vmem:[#allocation7 + $0x208] sm:$0xff]
    %v1736 = vld [vmem:[#allocation7 + $0x210] sm:$0xff]
    %v1737 = vld [vmem:[#allocation7 + $0x218] sm:$0xff]
    %v1738 = vld [vmem:[#allocation7 + $0x220] sm:$0xff]
    %v1739 = vld [vmem:[#allocation7 + $0x228] sm:$0xff]
    %v1740 = vld [vmem:[#allocation7 + $0x230] sm:$0xff]
    %v1741 = vld [vmem:[#allocation7 + $0x238] sm:$0xff]
    %v1742 = vld [vmem:[#allocation7 + $0x240] sm:$0xff]
    %v1743 = vld [vmem:[#allocation7 + $0x248] sm:$0xff]
    %v1744 = vld [vmem:[#allocation7 + $0x250] sm:$0xff]
    %v1745 = vld [vmem:[#allocation7 + $0x258] sm:$0xff]
    %v1746 = vld [vmem:[#allocation7 + $0x260] sm:$0xff]
    %v1747 = vld [vmem:[#allocation7 + $0x268] sm:$0xff]
    %v1748 = vld [vmem:[#allocation7 + $0x270] sm:$0xff]
    %v1749 = vld [vmem:[#allocation7 + $0x278] sm:$0xff]
    %v1750 = vld [vmem:[#allocation7 + $0x280] sm:$0xff]
    %v1751 = vld [vmem:[#allocation7 + $0x288] sm:$0xff]
    %v1752 = vld [vmem:[#allocation7 + $0x290] sm:$0xff]
    %v1753 = vld [vmem:[#allocation7 + $0x298] sm:$0xff]
    %v1754 = vld [vmem:[#allocation7 + $0x2a0] sm:$0xff]
    %v1755 = vld [vmem:[#allocation7 + $0x2a8] sm:$0xff]
    %v1756 = vld [vmem:[#allocation7 + $0x2b0] sm:$0xff]
    %v1757 = vld [vmem:[#allocation7 + $0x2b8] sm:$0xff]
    %v1758 = vld [vmem:[#allocation7 + $0x2c0] sm:$0xff]
    %v1759 = vld [vmem:[#allocation7 + $0x2c8] sm:$0xff]
    %v1760 = vld [vmem:[#allocation7 + $0x2d0] sm:$0xff]
    %v1761 = vld [vmem:[#allocation7 + $0x2d8] sm:$0xff]
    %v1762 = vld [vmem:[#allocation7 + $0x2e0] sm:$0xff]
    %v1763 = vld [vmem:[#allocation7 + $0x2e8] sm:$0xff]
    %v1764 = vld [vmem:[#allocation7 + $0x2f0] sm:$0xff]
    %v1765 = vld [vmem:[#allocation7 + $0x2f8] sm:$0xff]
    %v1766 = vld [vmem:[#allocation7 + $0x300] sm:$0xff]
    %v1767 = vld [vmem:[#allocation7 + $0x308] sm:$0xff]
    %v1768 = vld [vmem:[#allocation7 + $0x310] sm:$0xff]
    %v1769 = vld [vmem:[#allocation7 + $0x318] sm:$0xff]
    %v1770 = vld [vmem:[#allocation7 + $0x320] sm:$0xff]
    %v1771 = vld [vmem:[#allocation7 + $0x328] sm:$0xff]
    %v1772 = vld [vmem:[#allocation7 + $0x330] sm:$0xff]
    %v1773 = vld [vmem:[#allocation7 + $0x338] sm:$0xff]
    %v1774 = vld [vmem:[#allocation7 + $0x340] sm:$0xff]
    %v1775 = vld [vmem:[#allocation7 + $0x348] sm:$0xff]
    %v1776 = vld [vmem:[#allocation7 + $0x350] sm:$0xff]
    %v1777 = vld [vmem:[#allocation7 + $0x358] sm:$0xff]
    %v1778 = vld [vmem:[#allocation7 + $0x360] sm:$0xff]
    %v1779 = vld [vmem:[#allocation7 + $0x368] sm:$0xff]
    %v1780 = vld [vmem:[#allocation7 + $0x370] sm:$0xff]
    %v1781 = vld [vmem:[#allocation7 + $0x378] sm:$0xff]
    %v1782 = vld [vmem:[#allocation7 + $0x380] sm:$0xff]
    %v1783 = vld [vmem:[#allocation7 + $0x388] sm:$0xff]
    %v1784 = vld [vmem:[#allocation7 + $0x390] sm:$0xff]
    %v1785 = vld [vmem:[#allocation7 + $0x398] sm:$0xff]
    %v1786 = vld [vmem:[#allocation7 + $0x3a0] sm:$0xff]
    %v1787 = vld [vmem:[#allocation7 + $0x3a8] sm:$0xff]
    %v1788 = vld [vmem:[#allocation7 + $0x3b0] sm:$0xff]
    %v1789 = vld [vmem:[#allocation7 + $0x3b8] sm:$0xff]
    %v1790 = vld [vmem:[#allocation7 + $0x3c0] sm:$0xff]
    %v1791 = vld [vmem:[#allocation7 + $0x3c8] sm:$0xff]
    %v1792 = vld [vmem:[#allocation7 + $0x3d0] sm:$0xff]
    %v1793 = vld [vmem:[#allocation7 + $0x3d8] sm:$0xff]
    %v1794 = vld [vmem:[#allocation7 + $0x3e0] sm:$0xff]
    %v1795 = vld [vmem:[#allocation7 + $0x3e8] sm:$0xff]
    %v1796 = vld [vmem:[#allocation7 + $0x3f0] sm:$0xff]
    %v1797 = vld [vmem:[#allocation7 + $0x3f8] sm:$0xff]
    %v1798 = vld [vmem:[%s4] sm:$0xf]
    %v1800 = vlaneseq
    %v1801 = vshrl.u32 %v1800, 7
    %v1802 = vsub.s32 0, %v1801
    %v1803 = vrot.slane %v1798, %v1802
    %v1804 = vlaneseq
    %v1805 = vshrl.u32 %v1804, 7
    %v1806 = vsub.s32 1, %v1805
    %v1807 = vrot.slane %v1798, %v1806
    %v1808 = vlaneseq
    %v1809 = vshrl.u32 %v1808, 7
    %v1810 = vsub.s32 2, %v1809
    %v1811 = vrot.slane %v1798, %v1810
    %v1812 = vlaneseq
    %v1813 = vshrl.u32 %v1812, 7
    %v1814 = vsub.s32 3, %v1813
    %v1815 = vrot.slane %v1798, %v1814
    %v1948 = vunpack.c.l.b16 %v1670
    %v1949 = vunpack.c.h.b16 %v1670
    %v1950 = vunpack.c.l.b16 %v1671
    %v1951 = vunpack.c.h.b16 %v1671
    %v1952 = vunpack.c.l.b16 %v1672
    %v1953 = vunpack.c.h.b16 %v1672
    %v1954 = vunpack.c.l.b16 %v1673
    %v1955 = vunpack.c.h.b16 %v1673
    %v1956 = vunpack.c.l.b16 %v1674
    %v1957 = vunpack.c.h.b16 %v1674
    %v1958 = vunpack.c.l.b16 %v1675
    %v1959 = vunpack.c.h.b16 %v1675
    %v1960 = vunpack.c.l.b16 %v1676
    %v1961 = vunpack.c.h.b16 %v1676
    %v1962 = vunpack.c.l.b16 %v1677
    %v1963 = vunpack.c.h.b16 %v1677
    %v1964 = vunpack.c.l.b16 %v1678
    %v1965 = vunpack.c.h.b16 %v1678
    %v1966 = vunpack.c.l.b16 %v1679
    %v1967 = vunpack.c.h.b16 %v1679
    %v1968 = vunpack.c.l.b16 %v1680
    %v1969 = vunpack.c.h.b16 %v1680
    %v1970 = vunpack.c.l.b16 %v1681
    %v1971 = vunpack.c.h.b16 %v1681
    %v1972 = vunpack.c.l.b16 %v1682
    %v1973 = vunpack.c.h.b16 %v1682
    %v1974 = vunpack.c.l.b16 %v1683
    %v1975 = vunpack.c.h.b16 %v1683
    %v1976 = vunpack.c.l.b16 %v1684
    %v1977 = vunpack.c.h.b16 %v1684
    %v1978 = vunpack.c.l.b16 %v1685
    %v1979 = vunpack.c.h.b16 %v1685
    %v1980 = vunpack.c.l.b16 %v1686
    %v1981 = vunpack.c.h.b16 %v1686
    %v1982 = vunpack.c.l.b16 %v1687
    %v1983 = vunpack.c.h.b16 %v1687
    %v1984 = vunpack.c.l.b16 %v1688
    %v1985 = vunpack.c.h.b16 %v1688
    %v1986 = vunpack.c.l.b16 %v1689
    %v1987 = vunpack.c.h.b16 %v1689
    %v1988 = vunpack.c.l.b16 %v1690
    %v1989 = vunpack.c.h.b16 %v1690
    %v1990 = vunpack.c.l.b16 %v1691
    %v1991 = vunpack.c.h.b16 %v1691
    %v1992 = vunpack.c.l.b16 %v1692
    %v1993 = vunpack.c.h.b16 %v1692
    %v1994 = vunpack.c.l.b16 %v1693
    %v1995 = vunpack.c.h.b16 %v1693
    %v1996 = vunpack.c.l.b16 %v1694
    %v1997 = vunpack.c.h.b16 %v1694
    %v1998 = vunpack.c.l.b16 %v1695
    %v1999 = vunpack.c.h.b16 %v1695
    %v2000 = vunpack.c.l.b16 %v1696
    %v2001 = vunpack.c.h.b16 %v1696
    %v2002 = vunpack.c.l.b16 %v1697
    %v2003 = vunpack.c.h.b16 %v1697
    %v2004 = vunpack.c.l.b16 %v1698
    %v2005 = vunpack.c.h.b16 %v1698
    %v2006 = vunpack.c.l.b16 %v1699
    %v2007 = vunpack.c.h.b16 %v1699
    %v2008 = vunpack.c.l.b16 %v1700
    %v2009 = vunpack.c.h.b16 %v1700
    %v2010 = vunpack.c.l.b16 %v1701
    %v2011 = vunpack.c.h.b16 %v1701
    %v2012 = vunpack.c.l.b16 %v1702
    %v2013 = vunpack.c.h.b16 %v1702
    %v2014 = vunpack.c.l.b16 %v1703
    %v2015 = vunpack.c.h.b16 %v1703
    %v2016 = vunpack.c.l.b16 %v1704
    %v2017 = vunpack.c.h.b16 %v1704
    %v2018 = vunpack.c.l.b16 %v1705
    %v2019 = vunpack.c.h.b16 %v1705
    %v2020 = vunpack.c.l.b16 %v1706
    %v2021 = vunpack.c.h.b16 %v1706
    %v2022 = vunpack.c.l.b16 %v1707
    %v2023 = vunpack.c.h.b16 %v1707
    %v2024 = vunpack.c.l.b16 %v1708
    %v2025 = vunpack.c.h.b16 %v1708
    %v2026 = vunpack.c.l.b16 %v1709
    %v2027 = vunpack.c.h.b16 %v1709
    %v2028 = vunpack.c.l.b16 %v1710
    %v2029 = vunpack.c.h.b16 %v1710
    %v2030 = vunpack.c.l.b16 %v1711
    %v2031 = vunpack.c.h.b16 %v1711
    %v2032 = vunpack.c.l.b16 %v1712
    %v2033 = vunpack.c.h.b16 %v1712
    %v2034 = vunpack.c.l.b16 %v1713
    %v2035 = vunpack.c.h.b16 %v1713
    %v2036 = vunpack.c.l.b16 %v1714
    %v2037 = vunpack.c.h.b16 %v1714
    %v2038 = vunpack.c.l.b16 %v1715
    %v2039 = vunpack.c.h.b16 %v1715
    %v2040 = vunpack.c.l.b16 %v1716
    %v2041 = vunpack.c.h.b16 %v1716
    %v2042 = vunpack.c.l.b16 %v1717
    %v2043 = vunpack.c.h.b16 %v1717
    %v2044 = vunpack.c.l.b16 %v1718
    %v2045 = vunpack.c.h.b16 %v1718
    %v2046 = vunpack.c.l.b16 %v1719
    %v2047 = vunpack.c.h.b16 %v1719
    %v2048 = vunpack.c.l.b16 %v1720
    %v2049 = vunpack.c.h.b16 %v1720
    %v2050 = vunpack.c.l.b16 %v1721
    %v2051 = vunpack.c.h.b16 %v1721
    %v2052 = vunpack.c.l.b16 %v1722
    %v2053 = vunpack.c.h.b16 %v1722
    %v2054 = vunpack.c.l.b16 %v1723
    %v2055 = vunpack.c.h.b16 %v1723
    %v2056 = vunpack.c.l.b16 %v1724
    %v2057 = vunpack.c.h.b16 %v1724
    %v2058 = vunpack.c.l.b16 %v1725
    %v2059 = vunpack.c.h.b16 %v1725
    %v2060 = vunpack.c.l.b16 %v1726
    %v2061 = vunpack.c.h.b16 %v1726
    %v2062 = vunpack.c.l.b16 %v1727
    %v2063 = vunpack.c.h.b16 %v1727
    %v2064 = vunpack.c.l.b16 %v1728
    %v2065 = vunpack.c.h.b16 %v1728
    %v2066 = vunpack.c.l.b16 %v1729
    %v2067 = vunpack.c.h.b16 %v1729
    %v2068 = vunpack.c.l.b16 %v1730
    %v2069 = vunpack.c.h.b16 %v1730
    %v2070 = vunpack.c.l.b16 %v1731
    %v2071 = vunpack.c.h.b16 %v1731
    %v2072 = vunpack.c.l.b16 %v1732
    %v2073 = vunpack.c.h.b16 %v1732
    %v2074 = vunpack.c.l.b16 %v1733
    %v2075 = vunpack.c.h.b16 %v1733
    %v2076 = vunpack.c.l.b16 %v1734
    %v2077 = vunpack.c.h.b16 %v1734
    %v2078 = vunpack.c.l.b16 %v1735
    %v2079 = vunpack.c.h.b16 %v1735
    %v2080 = vunpack.c.l.b16 %v1736
    %v2081 = vunpack.c.h.b16 %v1736
    %v2082 = vunpack.c.l.b16 %v1737
    %v2083 = vunpack.c.h.b16 %v1737
    %v2084 = vunpack.c.l.b16 %v1738
    %v2085 = vunpack.c.h.b16 %v1738
    %v2086 = vunpack.c.l.b16 %v1739
    %v2087 = vunpack.c.h.b16 %v1739
    %v2088 = vunpack.c.l.b16 %v1740
    %v2089 = vunpack.c.h.b16 %v1740
    %v2090 = vunpack.c.l.b16 %v1741
    %v2091 = vunpack.c.h.b16 %v1741
    %v2092 = vunpack.c.l.b16 %v1742
    %v2093 = vunpack.c.h.b16 %v1742
    %v2094 = vunpack.c.l.b16 %v1743
    %v2095 = vunpack.c.h.b16 %v1743
    %v2096 = vunpack.c.l.b16 %v1744
    %v2097 = vunpack.c.h.b16 %v1744
    %v2098 = vunpack.c.l.b16 %v1745
    %v2099 = vunpack.c.h.b16 %v1745
    %v2100 = vunpack.c.l.b16 %v1746
    %v2101 = vunpack.c.h.b16 %v1746
    %v2102 = vunpack.c.l.b16 %v1747
    %v2103 = vunpack.c.h.b16 %v1747
    %v2104 = vunpack.c.l.b16 %v1748
    %v2105 = vunpack.c.h.b16 %v1748
    %v2106 = vunpack.c.l.b16 %v1749
    %v2107 = vunpack.c.h.b16 %v1749
    %v2108 = vunpack.c.l.b16 %v1750
    %v2109 = vunpack.c.h.b16 %v1750
    %v2110 = vunpack.c.l.b16 %v1751
    %v2111 = vunpack.c.h.b16 %v1751
    %v2112 = vunpack.c.l.b16 %v1752
    %v2113 = vunpack.c.h.b16 %v1752
    %v2114 = vunpack.c.l.b16 %v1753
    %v2115 = vunpack.c.h.b16 %v1753
    %v2116 = vunpack.c.l.b16 %v1754
    %v2117 = vunpack.c.h.b16 %v1754
    %v2118 = vunpack.c.l.b16 %v1755
    %v2119 = vunpack.c.h.b16 %v1755
    %v2120 = vunpack.c.l.b16 %v1756
    %v2121 = vunpack.c.h.b16 %v1756
    %v2122 = vunpack.c.l.b16 %v1757
    %v2123 = vunpack.c.h.b16 %v1757
    %v2124 = vunpack.c.l.b16 %v1758
    %v2125 = vunpack.c.h.b16 %v1758
    %v2126 = vunpack.c.l.b16 %v1759
    %v2127 = vunpack.c.h.b16 %v1759
    %v2128 = vunpack.c.l.b16 %v1760
    %v2129 = vunpack.c.h.b16 %v1760
    %v2130 = vunpack.c.l.b16 %v1761
    %v2131 = vunpack.c.h.b16 %v1761
    %v2132 = vunpack.c.l.b16 %v1762
    %v2133 = vunpack.c.h.b16 %v1762
    %v2134 = vunpack.c.l.b16 %v1763
    %v2135 = vunpack.c.h.b16 %v1763
    %v2136 = vunpack.c.l.b16 %v1764
    %v2137 = vunpack.c.h.b16 %v1764
    %v2138 = vunpack.c.l.b16 %v1765
    %v2139 = vunpack.c.h.b16 %v1765
    %v2140 = vunpack.c.l.b16 %v1766
    %v2141 = vunpack.c.h.b16 %v1766
    %v2142 = vunpack.c.l.b16 %v1767
    %v2143 = vunpack.c.h.b16 %v1767
    %v2144 = vunpack.c.l.b16 %v1768
    %v2145 = vunpack.c.h.b16 %v1768
    %v2146 = vunpack.c.l.b16 %v1769
    %v2147 = vunpack.c.h.b16 %v1769
    %v2148 = vunpack.c.l.b16 %v1770
    %v2149 = vunpack.c.h.b16 %v1770
    %v2150 = vunpack.c.l.b16 %v1771
    %v2151 = vunpack.c.h.b16 %v1771
    %v2152 = vunpack.c.l.b16 %v1772
    %v2153 = vunpack.c.h.b16 %v1772
    %v2154 = vunpack.c.l.b16 %v1773
    %v2155 = vunpack.c.h.b16 %v1773
    %v2156 = vunpack.c.l.b16 %v1774
    %v2157 = vunpack.c.h.b16 %v1774
    %v2158 = vunpack.c.l.b16 %v1775
    %v2159 = vunpack.c.h.b16 %v1775
    %v2160 = vunpack.c.l.b16 %v1776
    %v2161 = vunpack.c.h.b16 %v1776
    %v2162 = vunpack.c.l.b16 %v1777
    %v2163 = vunpack.c.h.b16 %v1777
    %v2164 = vunpack.c.l.b16 %v1778
    %v2165 = vunpack.c.h.b16 %v1778
    %v2166 = vunpack.c.l.b16 %v1779
    %v2167 = vunpack.c.h.b16 %v1779
    %v2168 = vunpack.c.l.b16 %v1780
    %v2169 = vunpack.c.h.b16 %v1780
    %v2170 = vunpack.c.l.b16 %v1781
    %v2171 = vunpack.c.h.b16 %v1781
    %v2172 = vunpack.c.l.b16 %v1782
    %v2173 = vunpack.c.h.b16 %v1782
    %v2174 = vunpack.c.l.b16 %v1783
    %v2175 = vunpack.c.h.b16 %v1783
    %v2176 = vunpack.c.l.b16 %v1784
    %v2177 = vunpack.c.h.b16 %v1784
    %v2178 = vunpack.c.l.b16 %v1785
    %v2179 = vunpack.c.h.b16 %v1785
    %v2180 = vunpack.c.l.b16 %v1786
    %v2181 = vunpack.c.h.b16 %v1786
    %v2182 = vunpack.c.l.b16 %v1787
    %v2183 = vunpack.c.h.b16 %v1787
    %v2184 = vunpack.c.l.b16 %v1788
    %v2185 = vunpack.c.h.b16 %v1788
    %v2186 = vunpack.c.l.b16 %v1789
    %v2187 = vunpack.c.h.b16 %v1789
    %v2188 = vunpack.c.l.b16 %v1790
    %v2189 = vunpack.c.h.b16 %v1790
    %v2190 = vunpack.c.l.b16 %v1791
    %v2191 = vunpack.c.h.b16 %v1791
    %v2192 = vunpack.c.l.b16 %v1792
    %v2193 = vunpack.c.h.b16 %v1792
    %v2194 = vunpack.c.l.b16 %v1793
    %v2195 = vunpack.c.h.b16 %v1793
    %v2196 = vunpack.c.l.b16 %v1794
    %v2197 = vunpack.c.h.b16 %v1794
    %v2198 = vunpack.c.l.b16 %v1795
    %v2199 = vunpack.c.h.b16 %v1795
    %v2200 = vunpack.c.l.b16 %v1796
    %v2201 = vunpack.c.h.b16 %v1796
    %v2202 = vunpack.c.l.b16 %v1797
    %v2203 = vunpack.c.h.b16 %v1797
    %v2204 = vpack.c.b16 %v1952, %v1948
    %v2205 = vpack.c.b16 %v1953, %v1949
    %v2206 = vpack.c.b16 %v1954, %v1950
    %v2207 = vpack.c.b16 %v1955, %v1951
    %v2208 = vpack.c.b16 %v1960, %v1956
    %v2209 = vpack.c.b16 %v1961, %v1957
    %v2210 = vpack.c.b16 %v1962, %v1958
    %v2211 = vpack.c.b16 %v1963, %v1959
    %v2212 = vpack.c.b16 %v1968, %v1964
    %v2213 = vpack.c.b16 %v1969, %v1965
    %v2214 = vpack.c.b16 %v1970, %v1966
    %v2215 = vpack.c.b16 %v1971, %v1967
    %v2216 = vpack.c.b16 %v1976, %v1972
    %v2217 = vpack.c.b16 %v1977, %v1973
    %v2218 = vpack.c.b16 %v1978, %v1974
    %v2219 = vpack.c.b16 %v1979, %v1975
    %v2220 = vpack.c.b16 %v1984, %v1980
    %v2221 = vpack.c.b16 %v1985, %v1981
    %v2222 = vpack.c.b16 %v1986, %v1982
    %v2223 = vpack.c.b16 %v1987, %v1983
    %v2224 = vpack.c.b16 %v1992, %v1988
    %v2225 = vpack.c.b16 %v1993, %v1989
    %v2226 = vpack.c.b16 %v1994, %v1990
    %v2227 = vpack.c.b16 %v1995, %v1991
    %v2228 = vpack.c.b16 %v2000, %v1996
    %v2229 = vpack.c.b16 %v2001, %v1997
    %v2230 = vpack.c.b16 %v2002, %v1998
    %v2231 = vpack.c.b16 %v2003, %v1999
    %v2232 = vpack.c.b16 %v2008, %v2004
    %v2233 = vpack.c.b16 %v2009, %v2005
    %v2234 = vpack.c.b16 %v2010, %v2006
    %v2235 = vpack.c.b16 %v2011, %v2007
    %v2236 = vpack.c.b16 %v2016, %v2012
    %v2237 = vpack.c.b16 %v2017, %v2013
    %v2238 = vpack.c.b16 %v2018, %v2014
    %v2239 = vpack.c.b16 %v2019, %v2015
    %v2240 = vpack.c.b16 %v2024, %v2020
    %v2241 = vpack.c.b16 %v2025, %v2021
    %v2242 = vpack.c.b16 %v2026, %v2022
    %v2243 = vpack.c.b16 %v2027, %v2023
    %v2244 = vpack.c.b16 %v2032, %v2028
    %v2245 = vpack.c.b16 %v2033, %v2029
    %v2246 = vpack.c.b16 %v2034, %v2030
    %v2247 = vpack.c.b16 %v2035, %v2031
    %v2248 = vpack.c.b16 %v2040, %v2036
    %v2249 = vpack.c.b16 %v2041, %v2037
    %v2250 = vpack.c.b16 %v2042, %v2038
    %v2251 = vpack.c.b16 %v2043, %v2039
    %v2252 = vpack.c.b16 %v2048, %v2044
    %v2253 = vpack.c.b16 %v2049, %v2045
    %v2254 = vpack.c.b16 %v2050, %v2046
    %v2255 = vpack.c.b16 %v2051, %v2047
    %v2256 = vpack.c.b16 %v2056, %v2052
    %v2257 = vpack.c.b16 %v2057, %v2053
    %v2258 = vpack.c.b16 %v2058, %v2054
    %v2259 = vpack.c.b16 %v2059, %v2055
    %v2260 = vpack.c.b16 %v2064, %v2060
    %v2261 = vpack.c.b16 %v2065, %v2061
    %v2262 = vpack.c.b16 %v2066, %v2062
    %v2263 = vpack.c.b16 %v2067, %v2063
    %v2264 = vpack.c.b16 %v2072, %v2068
    %v2265 = vpack.c.b16 %v2073, %v2069
    %v2266 = vpack.c.b16 %v2074, %v2070
    %v2267 = vpack.c.b16 %v2075, %v2071
    %v2268 = vpack.c.b16 %v2080, %v2076
    %v2269 = vpack.c.b16 %v2081, %v2077
    %v2270 = vpack.c.b16 %v2082, %v2078
    %v2271 = vpack.c.b16 %v2083, %v2079
    %v2272 = vpack.c.b16 %v2088, %v2084
    %v2273 = vpack.c.b16 %v2089, %v2085
    %v2274 = vpack.c.b16 %v2090, %v2086
    %v2275 = vpack.c.b16 %v2091, %v2087
    %v2276 = vpack.c.b16 %v2096, %v2092
    %v2277 = vpack.c.b16 %v2097, %v2093
    %v2278 = vpack.c.b16 %v2098, %v2094
    %v2279 = vpack.c.b16 %v2099, %v2095
    %v2280 = vpack.c.b16 %v2104, %v2100
    %v2281 = vpack.c.b16 %v2105, %v2101
    %v2282 = vpack.c.b16 %v2106, %v2102
    %v2283 = vpack.c.b16 %v2107, %v2103
    %v2284 = vpack.c.b16 %v2112, %v2108
    %v2285 = vpack.c.b16 %v2113, %v2109
    %v2286 = vpack.c.b16 %v2114, %v2110
    %v2287 = vpack.c.b16 %v2115, %v2111
    %v2288 = vpack.c.b16 %v2120, %v2116
    %v2289 = vpack.c.b16 %v2121, %v2117
    %v2290 = vpack.c.b16 %v2122, %v2118
    %v2291 = vpack.c.b16 %v2123, %v2119
    %v2292 = vpack.c.b16 %v2128, %v2124
    %v2293 = vpack.c.b16 %v2129, %v2125
    %v2294 = vpack.c.b16 %v2130, %v2126
    %v2295 = vpack.c.b16 %v2131, %v2127
    %v2296 = vpack.c.b16 %v2136, %v2132
    %v2297 = vpack.c.b16 %v2137, %v2133
    %v2298 = vpack.c.b16 %v2138, %v2134
    %v2299 = vpack.c.b16 %v2139, %v2135
    %v2300 = vpack.c.b16 %v2144, %v2140
    %v2301 = vpack.c.b16 %v2145, %v2141
    %v2302 = vpack.c.b16 %v2146, %v2142
    %v2303 = vpack.c.b16 %v2147, %v2143
    %v2304 = vpack.c.b16 %v2152, %v2148
    %v2305 = vpack.c.b16 %v2153, %v2149
    %v2306 = vpack.c.b16 %v2154, %v2150
    %v2307 = vpack.c.b16 %v2155, %v2151
    %v2308 = vpack.c.b16 %v2160, %v2156
    %v2309 = vpack.c.b16 %v2161, %v2157
    %v2310 = vpack.c.b16 %v2162, %v2158
    %v2311 = vpack.c.b16 %v2163, %v2159
    %v2312 = vpack.c.b16 %v2168, %v2164
    %v2313 = vpack.c.b16 %v2169, %v2165
    %v2314 = vpack.c.b16 %v2170, %v2166
    %v2315 = vpack.c.b16 %v2171, %v2167
    %v2316 = vpack.c.b16 %v2176, %v2172
    %v2317 = vpack.c.b16 %v2177, %v2173
    %v2318 = vpack.c.b16 %v2178, %v2174
    %v2319 = vpack.c.b16 %v2179, %v2175
    %v2320 = vpack.c.b16 %v2184, %v2180
    %v2321 = vpack.c.b16 %v2185, %v2181
    %v2322 = vpack.c.b16 %v2186, %v2182
    %v2323 = vpack.c.b16 %v2187, %v2183
    %v2324 = vpack.c.b16 %v2192, %v2188
    %v2325 = vpack.c.b16 %v2193, %v2189
    %v2326 = vpack.c.b16 %v2194, %v2190
    %v2327 = vpack.c.b16 %v2195, %v2191
    %v2328 = vpack.c.b16 %v2200, %v2196
    %v2329 = vpack.c.b16 %v2201, %v2197
    %v2330 = vpack.c.b16 %v2202, %v2198
    %v2331 = vpack.c.b16 %v2203, %v2199
    %2460 = vmatprep.subr.bf16.mxu0 %v2205
    %2461 = vmatpush1.bf16.msra.mxu0 %v2204
    %2462 = vmatprep.subr.bf16.mxu0 %v2209
    %2463 = vmatpush1.bf16.msra.mxu0 %v2208
    %2464 = vmatprep.subr.bf16.mxu0 %v2213
    %2465 = vmatpush1.bf16.msra.mxu0 %v2212
    %2466 = vmatprep.subr.bf16.mxu0 %v2217
    %2467 = vmatpush1.bf16.msra.mxu0 %v2216
    %2468 = vmatprep.subr.bf16.mxu0 %v2221
    %2469 = vmatpush1.bf16.msra.mxu0 %v2220
    %2470 = vmatprep.subr.bf16.mxu0 %v2225
    %2471 = vmatpush1.bf16.msra.mxu0 %v2224
    %2472 = vmatprep.subr.bf16.mxu0 %v2229
    %2473 = vmatpush1.bf16.msra.mxu0 %v2228
    %2474 = vmatprep.subr.bf16.mxu0 %v2233
    %2475 = vmatpush1.bf16.msra.mxu0 %v2232
    %2476 = vmatprep.subr.bf16.mxu0 %v2237
    %2477 = vmatpush1.bf16.msra.mxu0 %v2236
    %2478 = vmatprep.subr.bf16.mxu0 %v2241
    %2479 = vmatpush1.bf16.msra.mxu0 %v2240
    %2480 = vmatprep.subr.bf16.mxu0 %v2245
    %2481 = vmatpush1.bf16.msra.mxu0 %v2244
    %2482 = vmatprep.subr.bf16.mxu0 %v2249
    %2483 = vmatpush1.bf16.msra.mxu0 %v2248
    %2484 = vmatprep.subr.bf16.mxu0 %v2253
    %2485 = vmatpush1.bf16.msra.mxu0 %v2252
    %2486 = vmatprep.subr.bf16.mxu0 %v2257
    %2487 = vmatpush1.bf16.msra.mxu0 %v2256
    %2488 = vmatprep.subr.bf16.mxu0 %v2261
    %2489 = vmatpush1.bf16.msra.mxu0 %v2260
    %2490 = vmatprep.subr.bf16.mxu0 %v2265
    %2491 = vmatpush1.bf16.msra.mxu0 %v2264
    %2492 = vmatprep.mubr.bf16.mxu0 %v1667
    %2493 = vmatmul.mubr.bf16.gmra.mrb[0].mxu0 %v1666
    %v2494 = vpop.f32.mrb[0].mxu0
    %v2495 = vadd.f32 %v1803, %v2494
    %v2496 = vpop.f32.mrb[0].mxu0
    %v2497 = vadd.f32 %v1807, %v2496
    %v2498 = vpop.f32.mrb[0].mxu0
    %v2499 = vpop.f32.mrb[0].mxu0
    %2500 = vdwg.mxu0
    %2501 = vmatprep.subr.bf16.mxu0 %v2269
    %2502 = vmatpush1.bf16.msra.mxu0 %v2268
    %2503 = vmatprep.subr.bf16.mxu0 %v2273
    %2504 = vmatpush1.bf16.msra.mxu0 %v2272
    %2505 = vmatprep.subr.bf16.mxu0 %v2277
    %2506 = vmatpush1.bf16.msra.mxu0 %v2276
    %2507 = vmatprep.subr.bf16.mxu0 %v2281
    %2508 = vmatpush1.bf16.msra.mxu0 %v2280
    %2509 = vmatprep.subr.bf16.mxu0 %v2285
    %2510 = vmatpush1.bf16.msra.mxu0 %v2284
    %2511 = vmatprep.subr.bf16.mxu0 %v2289
    %2512 = vmatpush1.bf16.msra.mxu0 %v2288
    %2513 = vmatprep.subr.bf16.mxu0 %v2293
    %2514 = vmatpush1.bf16.msra.mxu0 %v2292
    %2515 = vmatprep.subr.bf16.mxu0 %v2297
    %2516 = vmatpush1.bf16.msra.mxu0 %v2296
    %2517 = vmatprep.subr.bf16.mxu0 %v2301
    %2518 = vmatpush1.bf16.msra.mxu0 %v2300
    %2519 = vmatprep.subr.bf16.mxu0 %v2305
    %2520 = vmatpush1.bf16.msra.mxu0 %v2304
    %2521 = vmatprep.subr.bf16.mxu0 %v2309
    %2522 = vmatpush1.bf16.msra.mxu0 %v2308
    %2523 = vmatprep.subr.bf16.mxu0 %v2313
    %2524 = vmatpush1.bf16.msra.mxu0 %v2312
    %2525 = vmatprep.subr.bf16.mxu0 %v2317
    %2526 = vmatpush1.bf16.msra.mxu0 %v2316
    %2527 = vmatprep.subr.bf16.mxu0 %v2321
    %2528 = vmatpush1.bf16.msra.mxu0 %v2320
    %2529 = vmatprep.subr.bf16.mxu0 %v2325
    %2530 = vmatpush1.bf16.msra.mxu0 %v2324
    %2531 = vmatprep.subr.bf16.mxu0 %v2329
    %2532 = vmatpush1.bf16.msra.mxu0 %v2328
    %2533 = vmatprep.mubr.bf16.mxu0 %v1669
    %2534 = vmatmul.mubr.bf16.gmra.mrb[0].mxu0 %v1668
    %v2535 = vpop.f32.mrb[0].mxu0
    %v2536 = vadd.f32 %v2495, %v2535
    %v2537 = vpop.f32.mrb[0].mxu0
    %v2538 = vadd.f32 %v2497, %v2537
    %v2539 = vpop.f32.mrb[0].mxu0
    %v2540 = vpop.f32.mrb[0].mxu0
    %2541 = vdwg.mxu0
    %2542 = vmatprep.subr.bf16.mxu0 %v2207
    %2543 = vmatpush1.bf16.msra.mxu0 %v2206
    %2544 = vmatprep.subr.bf16.mxu0 %v2211
    %2545 = vmatpush1.bf16.msra.mxu0 %v2210
    %2546 = vmatprep.subr.bf16.mxu0 %v2215
    %2547 = vmatpush1.bf16.msra.mxu0 %v2214
    %2548 = vmatprep.subr.bf16.mxu0 %v2219
    %2549 = vmatpush1.bf16.msra.mxu0 %v2218
    %2550 = vmatprep.subr.bf16.mxu0 %v2223
    %2551 = vmatpush1.bf16.msra.mxu0 %v2222
    %2552 = vmatprep.subr.bf16.mxu0 %v2227
    %2553 = vmatpush1.bf16.msra.mxu0 %v2226
    %2554 = vmatprep.subr.bf16.mxu0 %v2231
    %2555 = vmatpush1.bf16.msra.mxu0 %v2230
    %2556 = vmatprep.subr.bf16.mxu0 %v2235
    %2557 = vmatpush1.bf16.msra.mxu0 %v2234
    %2558 = vmatprep.subr.bf16.mxu0 %v2239
    %2559 = vmatpush1.bf16.msra.mxu0 %v2238
    %2560 = vmatprep.subr.bf16.mxu0 %v2243
    %2561 = vmatpush1.bf16.msra.mxu0 %v2242
    %2562 = vmatprep.subr.bf16.mxu0 %v2247
    %2563 = vmatpush1.bf16.msra.mxu0 %v2246
    %2564 = vmatprep.subr.bf16.mxu0 %v2251
    %2565 = vmatpush1.bf16.msra.mxu0 %v2250
    %2566 = vmatprep.subr.bf16.mxu0 %v2255
    %2567 = vmatpush1.bf16.msra.mxu0 %v2254
    %2568 = vmatprep.subr.bf16.mxu0 %v2259
    %2569 = vmatpush1.bf16.msra.mxu0 %v2258
    %2570 = vmatprep.subr.bf16.mxu0 %v2263
    %2571 = vmatpush1.bf16.msra.mxu0 %v2262
    %2572 = vmatprep.subr.bf16.mxu0 %v2267
    %2573 = vmatpush1.bf16.msra.mxu0 %v2266
    %2574 = vmatprep.mubr.bf16.mxu0 %v1667
    %2575 = vmatmul.mubr.bf16.gmra.mrb[0].mxu0 %v1666
    %v2576 = vpop.f32.mrb[0].mxu0
    %v2577 = vadd.f32 %v1811, %v2576
    %v2578 = vpop.f32.mrb[0].mxu0
    %v2579 = vadd.f32 %v1815, %v2578
    %v2580 = vpop.f32.mrb[0].mxu0
    %v2581 = vpop.f32.mrb[0].mxu0
    %2582 = vdwg.mxu0
    %2583 = vmatprep.subr.bf16.mxu0 %v2271
    %2584 = vmatpush1.bf16.msra.mxu0 %v2270
    %2585 = vmatprep.subr.bf16.mxu0 %v2275
    %2586 = vmatpush1.bf16.msra.mxu0 %v2274
    %2587 = vmatprep.subr.bf16.mxu0 %v2279
    %2588 = vmatpush1.bf16.msra.mxu0 %v2278
    %2589 = vmatprep.subr.bf16.mxu0 %v2283
    %2590 = vmatpush1.bf16.msra.mxu0 %v2282
    %2591 = vmatprep.subr.bf16.mxu0 %v2287
    %2592 = vmatpush1.bf16.msra.mxu0 %v2286
    %2593 = vmatprep.subr.bf16.mxu0 %v2291
    %2594 = vmatpush1.bf16.msra.mxu0 %v2290
    %2595 = vmatprep.subr.bf16.mxu0 %v2295
    %2596 = vmatpush1.bf16.msra.mxu0 %v2294
    %2597 = vmatprep.subr.bf16.mxu0 %v2299
    %2598 = vmatpush1.bf16.msra.mxu0 %v2298
    %2599 = vmatprep.subr.bf16.mxu0 %v2303
    %2600 = vmatpush1.bf16.msra.mxu0 %v2302
    %2601 = vmatprep.subr.bf16.mxu0 %v2307
    %2602 = vmatpush1.bf16.msra.mxu0 %v2306
    %2603 = vmatprep.subr.bf16.mxu0 %v2311
    %2604 = vmatpush1.bf16.msra.mxu0 %v2310
    %2605 = vmatprep.subr.bf16.mxu0 %v2315
    %2606 = vmatpush1.bf16.msra.mxu0 %v2314
    %2607 = vmatprep.subr.bf16.mxu0 %v2319
    %2608 = vmatpush1.bf16.msra.mxu0 %v2318
    %2609 = vmatprep.subr.bf16.mxu0 %v2323
    %2610 = vmatpush1.bf16.msra.mxu0 %v2322
    %2611 = vmatprep.subr.bf16.mxu0 %v2327
    %2612 = vmatpush1.bf16.msra.mxu0 %v2326
    %2613 = vmatprep.subr.bf16.mxu0 %v2331
    %2614 = vmatpush1.bf16.msra.mxu0 %v2330
    %2615 = vmatprep.mubr.bf16.mxu0 %v1669
    %2616 = vmatmul.mubr.bf16.gmra.mrb[0].mxu0 %v1668
    %v2617 = vpop.f32.mrb[0].mxu0
    %v2618 = vadd.f32 %v2577, %v2617
    %v2619 = vpop.f32.mrb[0].mxu0
    %v2620 = vadd.f32 %v2579, %v2619
    %v2621 = vpop.f32.mrb[0].mxu0
    %v2622 = vpop.f32.mrb[0].mxu0
    %2623 = vdwg.mxu0
    %v2624 = vmax.f32 %v2536, 0.0
    %v2625 = vmax.f32 %v2538, 0.0
    %v2626 = vmax.f32 %v2618, 0.0
    %v2627 = vmax.f32 %v2620, 0.0
    %v2628 = vpack.c.bf16 %v2624, %v2624
    %v2629 = vpack.c.bf16 %v2625, %v2625
    %v2630 = vpack.c.bf16 %v2626, %v2626
    %v2631 = vpack.c.bf16 %v2627, %v2627
    %v2632 = vld [vmem:[#allocation8] sm:$0xf]
    %v2633 = vld [vmem:[#allocation8 + $0x4] sm:$0xf]
    %v2634 = vld [vmem:[#allocation8 + $0x8] sm:$0xf]
    %v2635 = vld [vmem:[#allocation8 + $0xc] sm:$0xf]
    %v2636 = vld [vmem:[#allocation8 + $0x10] sm:$0xf]
    %v2637 = vld [vmem:[#allocation8 + $0x14] sm:$0xf]
    %v2638 = vld [vmem:[#allocation8 + $0x18] sm:$0xf]
    %v2639 = vld [vmem:[#allocation8 + $0x1c] sm:$0xf]
    %v2640 = vld [vmem:[#allocation8 + $0x20] sm:$0xf]
    %v2641 = vld [vmem:[#allocation8 + $0x24] sm:$0xf]
    %v2642 = vld [vmem:[#allocation8 + $0x28] sm:$0xf]
    %v2643 = vld [vmem:[#allocation8 + $0x2c] sm:$0xf]
    %v2644 = vld [vmem:[#allocation8 + $0x30] sm:$0xf]
    %v2645 = vld [vmem:[#allocation8 + $0x34] sm:$0xf]
    %v2646 = vld [vmem:[#allocation8 + $0x38] sm:$0xf]
    %v2647 = vld [vmem:[#allocation8 + $0x3c] sm:$0xf]
    %v2648 = vld [vmem:[#allocation8 + $0x40] sm:$0xf]
    %v2649 = vld [vmem:[#allocation8 + $0x44] sm:$0xf]
    %v2650 = vld [vmem:[#allocation8 + $0x48] sm:$0xf]
    %v2651 = vld [vmem:[#allocation8 + $0x4c] sm:$0xf]
    %v2652 = vld [vmem:[#allocation8 + $0x50] sm:$0xf]
    %v2653 = vld [vmem:[#allocation8 + $0x54] sm:$0xf]
    %v2654 = vld [vmem:[#allocation8 + $0x58] sm:$0xf]
    %v2655 = vld [vmem:[#allocation8 + $0x5c] sm:$0xf]
    %v2656 = vld [vmem:[#allocation8 + $0x60] sm:$0xf]
    %v2657 = vld [vmem:[#allocation8 + $0x64] sm:$0xf]
    %v2658 = vld [vmem:[#allocation8 + $0x68] sm:$0xf]
    %v2659 = vld [vmem:[#allocation8 + $0x6c] sm:$0xf]
    %v2660 = vld [vmem:[#allocation8 + $0x70] sm:$0xf]
    %v2661 = vld [vmem:[#allocation8 + $0x74] sm:$0xf]
    %v2662 = vld [vmem:[#allocation8 + $0x78] sm:$0xf]
    %v2663 = vld [vmem:[#allocation8 + $0x7c] sm:$0xf]
    %v2664 = vld [vmem:[#allocation8 + $0x80] sm:$0xf]
    %v2665 = vld [vmem:[#allocation8 + $0x84] sm:$0xf]
    %v2666 = vld [vmem:[#allocation8 + $0x88] sm:$0xf]
    %v2667 = vld [vmem:[#allocation8 + $0x8c] sm:$0xf]
    %v2668 = vld [vmem:[#allocation8 + $0x90] sm:$0xf]
    %v2669 = vld [vmem:[#allocation8 + $0x94] sm:$0xf]
    %v2670 = vld [vmem:[#allocation8 + $0x98] sm:$0xf]
    %v2671 = vld [vmem:[#allocation8 + $0x9c] sm:$0xf]
    %v2672 = vld [vmem:[#allocation8 + $0xa0] sm:$0xf]
    %v2673 = vld [vmem:[#allocation8 + $0xa4] sm:$0xf]
    %v2674 = vld [vmem:[#allocation8 + $0xa8] sm:$0xf]
    %v2675 = vld [vmem:[#allocation8 + $0xac] sm:$0xf]
    %v2676 = vld [vmem:[#allocation8 + $0xb0] sm:$0xf]
    %v2677 = vld [vmem:[#allocation8 + $0xb4] sm:$0xf]
    %v2678 = vld [vmem:[#allocation8 + $0xb8] sm:$0xf]
    %v2679 = vld [vmem:[#allocation8 + $0xbc] sm:$0xf]
    %v2680 = vld [vmem:[#allocation8 + $0xc0] sm:$0xf]
    %v2681 = vld [vmem:[#allocation8 + $0xc4] sm:$0xf]
    %v2682 = vld [vmem:[#allocation8 + $0xc8] sm:$0xf]
    %v2683 = vld [vmem:[#allocation8 + $0xcc] sm:$0xf]
    %v2684 = vld [vmem:[#allocation8 + $0xd0] sm:$0xf]
    %v2685 = vld [vmem:[#allocation8 + $0xd4] sm:$0xf]
    %v2686 = vld [vmem:[#allocation8 + $0xd8] sm:$0xf]
    %v2687 = vld [vmem:[#allocation8 + $0xdc] sm:$0xf]
    %v2688 = vld [vmem:[#allocation8 + $0xe0] sm:$0xf]
    %v2689 = vld [vmem:[#allocation8 + $0xe4] sm:$0xf]
    %v2690 = vld [vmem:[#allocation8 + $0xe8] sm:$0xf]
    %v2691 = vld [vmem:[#allocation8 + $0xec] sm:$0xf]
    %v2692 = vld [vmem:[#allocation8 + $0xf0] sm:$0xf]
    %v2693 = vld [vmem:[#allocation8 + $0xf4] sm:$0xf]
    %v2694 = vld [vmem:[#allocation8 + $0xf8] sm:$0xf]
    %v2695 = vld [vmem:[#allocation8 + $0xfc] sm:$0xf]
    %v2696 = vld [vmem:[%s6] sm:$0x1]
    %v2698 = vlaneseq
    %v2699 = vshrl.u32 %v2698, 7
    %v2700 = vsub.s32 0, %v2699
    %v2701 = vrot.slane %v2696, %v2700
    %v2767 = vunpack.c.l.b16 %v2632
    %v2768 = vunpack.c.l.b16 %v2633
    %v2769 = vunpack.c.l.b16 %v2634
    %v2770 = vunpack.c.l.b16 %v2635
    %v2771 = vunpack.c.l.b16 %v2636
    %v2772 = vunpack.c.l.b16 %v2637
    %v2773 = vunpack.c.l.b16 %v2638
    %v2774 = vunpack.c.l.b16 %v2639
    %v2775 = vunpack.c.l.b16 %v2640
    %v2776 = vunpack.c.l.b16 %v2641
    %v2777 = vunpack.c.l.b16 %v2642
    %v2778 = vunpack.c.l.b16 %v2643
    %v2779 = vunpack.c.l.b16 %v2644
    %v2780 = vunpack.c.l.b16 %v2645
    %v2781 = vunpack.c.l.b16 %v2646
    %v2782 = vunpack.c.l.b16 %v2647
    %v2783 = vunpack.c.l.b16 %v2648
    %v2784 = vunpack.c.l.b16 %v2649
    %v2785 = vunpack.c.l.b16 %v2650
    %v2786 = vunpack.c.l.b16 %v2651
    %v2787 = vunpack.c.l.b16 %v2652
    %v2788 = vunpack.c.l.b16 %v2653
    %v2789 = vunpack.c.l.b16 %v2654
    %v2790 = vunpack.c.l.b16 %v2655
    %v2791 = vunpack.c.l.b16 %v2656
    %v2792 = vunpack.c.l.b16 %v2657
    %v2793 = vunpack.c.l.b16 %v2658
    %v2794 = vunpack.c.l.b16 %v2659
    %v2795 = vunpack.c.l.b16 %v2660
    %v2796 = vunpack.c.l.b16 %v2661
    %v2797 = vunpack.c.l.b16 %v2662
    %v2798 = vunpack.c.l.b16 %v2663
    %v2799 = vunpack.c.l.b16 %v2664
    %v2800 = vunpack.c.l.b16 %v2665
    %v2801 = vunpack.c.l.b16 %v2666
    %v2802 = vunpack.c.l.b16 %v2667
    %v2803 = vunpack.c.l.b16 %v2668
    %v2804 = vunpack.c.l.b16 %v2669
    %v2805 = vunpack.c.l.b16 %v2670
    %v2806 = vunpack.c.l.b16 %v2671
    %v2807 = vunpack.c.l.b16 %v2672
    %v2808 = vunpack.c.l.b16 %v2673
    %v2809 = vunpack.c.l.b16 %v2674
    %v2810 = vunpack.c.l.b16 %v2675
    %v2811 = vunpack.c.l.b16 %v2676
    %v2812 = vunpack.c.l.b16 %v2677
    %v2813 = vunpack.c.l.b16 %v2678
    %v2814 = vunpack.c.l.b16 %v2679
    %v2815 = vunpack.c.l.b16 %v2680
    %v2816 = vunpack.c.l.b16 %v2681
    %v2817 = vunpack.c.l.b16 %v2682
    %v2818 = vunpack.c.l.b16 %v2683
    %v2819 = vunpack.c.l.b16 %v2684
    %v2820 = vunpack.c.l.b16 %v2685
    %v2821 = vunpack.c.l.b16 %v2686
    %v2822 = vunpack.c.l.b16 %v2687
    %v2823 = vunpack.c.l.b16 %v2688
    %v2824 = vunpack.c.l.b16 %v2689
    %v2825 = vunpack.c.l.b16 %v2690
    %v2826 = vunpack.c.l.b16 %v2691
    %v2827 = vunpack.c.l.b16 %v2692
    %v2828 = vunpack.c.l.b16 %v2693
    %v2829 = vunpack.c.l.b16 %v2694
    %v2830 = vunpack.c.l.b16 %v2695
    %v2831 = vpack.c.b16 %v2768, %v2767
    %v2832 = vpack.c.b16 %v2770, %v2769
    %v2833 = vpack.c.b16 %v2772, %v2771
    %v2834 = vpack.c.b16 %v2774, %v2773
    %v2835 = vpack.c.b16 %v2776, %v2775
    %v2836 = vpack.c.b16 %v2778, %v2777
    %v2837 = vpack.c.b16 %v2780, %v2779
    %v2838 = vpack.c.b16 %v2782, %v2781
    %v2839 = vpack.c.b16 %v2784, %v2783
    %v2840 = vpack.c.b16 %v2786, %v2785
    %v2841 = vpack.c.b16 %v2788, %v2787
    %v2842 = vpack.c.b16 %v2790, %v2789
    %v2843 = vpack.c.b16 %v2792, %v2791
    %v2844 = vpack.c.b16 %v2794, %v2793
    %v2845 = vpack.c.b16 %v2796, %v2795
    %v2846 = vpack.c.b16 %v2798, %v2797
    %v2847 = vpack.c.b16 %v2800, %v2799
    %v2848 = vpack.c.b16 %v2802, %v2801
    %v2849 = vpack.c.b16 %v2804, %v2803
    %v2850 = vpack.c.b16 %v2806, %v2805
    %v2851 = vpack.c.b16 %v2808, %v2807
    %v2852 = vpack.c.b16 %v2810, %v2809
    %v2853 = vpack.c.b16 %v2812, %v2811
    %v2854 = vpack.c.b16 %v2814, %v2813
    %v2855 = vpack.c.b16 %v2816, %v2815
    %v2856 = vpack.c.b16 %v2818, %v2817
    %v2857 = vpack.c.b16 %v2820, %v2819
    %v2858 = vpack.c.b16 %v2822, %v2821
    %v2859 = vpack.c.b16 %v2824, %v2823
    %v2860 = vpack.c.b16 %v2826, %v2825
    %v2861 = vpack.c.b16 %v2828, %v2827
    %v2862 = vpack.c.b16 %v2830, %v2829
    %2895 = vmatprep.subr.bf16.mxu0 0
    %2896 = vmatpush1.bf16.msra.mxu0 %v2831
    %2897 = vmatprep.subr.bf16.mxu0 0
    %2898 = vmatpush1.bf16.msra.mxu0 %v2832
    %2899 = vmatprep.subr.bf16.mxu0 0
    %2900 = vmatpush1.bf16.msra.mxu0 %v2833
    %2901 = vmatprep.subr.bf16.mxu0 0
    %2902 = vmatpush1.bf16.msra.mxu0 %v2834
    %2903 = vmatprep.subr.bf16.mxu0 0
    %2904 = vmatpush1.bf16.msra.mxu0 %v2835
    %2905 = vmatprep.subr.bf16.mxu0 0
    %2906 = vmatpush1.bf16.msra.mxu0 %v2836
    %2907 = vmatprep.subr.bf16.mxu0 0
    %2908 = vmatpush1.bf16.msra.mxu0 %v2837
    %2909 = vmatprep.subr.bf16.mxu0 0
    %2910 = vmatpush1.bf16.msra.mxu0 %v2838
    %2911 = vmatprep.subr.bf16.mxu0 0
    %2912 = vmatpush1.bf16.msra.mxu0 %v2839
    %2913 = vmatprep.subr.bf16.mxu0 0
    %2914 = vmatpush1.bf16.msra.mxu0 %v2840
    %2915 = vmatprep.subr.bf16.mxu0 0
    %2916 = vmatpush1.bf16.msra.mxu0 %v2841
    %2917 = vmatprep.subr.bf16.mxu0 0
    %2918 = vmatpush1.bf16.msra.mxu0 %v2842
    %2919 = vmatprep.subr.bf16.mxu0 0
    %2920 = vmatpush1.bf16.msra.mxu0 %v2843
    %2921 = vmatprep.subr.bf16.mxu0 0
    %2922 = vmatpush1.bf16.msra.mxu0 %v2844
    %2923 = vmatprep.subr.bf16.mxu0 0
    %2924 = vmatpush1.bf16.msra.mxu0 %v2845
    %2925 = vmatprep.subr.bf16.mxu0 0
    %2926 = vmatpush1.bf16.msra.mxu0 %v2846
    %2927 = vmatprep.mubr.bf16.mxu0 %v2629
    %2928 = vmatmul.mubr.bf16.gmra.mrb[0].mxu0 %v2628
    %v2929 = vpop.f32.mrb[0].mxu0
    %v2930 = vadd.f32 %v2701, %v2929
    %v2931 = vpop.f32.mrb[0].mxu0
    %v2932 = vpop.f32.mrb[0].mxu0
    %v2933 = vpop.f32.mrb[0].mxu0
    %2934 = vdwg.mxu0
    %2935 = vmatprep.subr.bf16.mxu0 0
    %2936 = vmatpush1.bf16.msra.mxu0 %v2847
    %2937 = vmatprep.subr.bf16.mxu0 0
    %2938 = vmatpush1.bf16.msra.mxu0 %v2848
    %2939 = vmatprep.subr.bf16.mxu0 0
    %2940 = vmatpush1.bf16.msra.mxu0 %v2849
    %2941 = vmatprep.subr.bf16.mxu0 0
    %2942 = vmatpush1.bf16.msra.mxu0 %v2850
    %2943 = vmatprep.subr.bf16.mxu0 0
    %2944 = vmatpush1.bf16.msra.mxu0 %v2851
    %2945 = vmatprep.subr.bf16.mxu0 0
    %2946 = vmatpush1.bf16.msra.mxu0 %v2852
    %2947 = vmatprep.subr.bf16.mxu0 0
    %2948 = vmatpush1.bf16.msra.mxu0 %v2853
    %2949 = vmatprep.subr.bf16.mxu0 0
    %2950 = vmatpush1.bf16.msra.mxu0 %v2854
    %2951 = vmatprep.subr.bf16.mxu0 0
    %2952 = vmatpush1.bf16.msra.mxu0 %v2855
    %2953 = vmatprep.subr.bf16.mxu0 0
    %2954 = vmatpush1.bf16.msra.mxu0 %v2856
    %2955 = vmatprep.subr.bf16.mxu0 0
    %2956 = vmatpush1.bf16.msra.mxu0 %v2857
    %2957 = vmatprep.subr.bf16.mxu0 0
    %2958 = vmatpush1.bf16.msra.mxu0 %v2858
    %2959 = vmatprep.subr.bf16.mxu0 0
    %2960 = vmatpush1.bf16.msra.mxu0 %v2859
    %2961 = vmatprep.subr.bf16.mxu0 0
    %2962 = vmatpush1.bf16.msra.mxu0 %v2860
    %2963 = vmatprep.subr.bf16.mxu0 0
    %2964 = vmatpush1.bf16.msra.mxu0 %v2861
    %2965 = vmatprep.subr.bf16.mxu0 0
    %2966 = vmatpush1.bf16.msra.mxu0 %v2862
    %2967 = vmatprep.mubr.bf16.mxu0 %v2631
    %2968 = vmatmul.mubr.bf16.gmra.mrb[0].mxu0 %v2630
    %v2969 = vpop.f32.mrb[0].mxu0
    %v2970 = vadd.f32 %v2930, %v2969
    %v2971 = vpop.f32.mrb[0].mxu0
    %v2972 = vpop.f32.mrb[0].mxu0
    %v2973 = vpop.f32.mrb[0].mxu0
    %2974 = vdwg.mxu0
    %2975 = vst [vmem:[#allocation10] sm:$0x3] %v2970
    // Predicated region
    $region46: #{tpu_custom_call.1} parent=1 // pred_check
      _
    $region47: #{tpu_custom_call.1} parent=1 // pred_check_branch
      %2977 = sbr.rel (0) target = $region49
    $region48: #{tpu_custom_call.1} parent=1 // pred_region
      %s2979 = ssub.s32 32, 32
      %2980 = vsyncadd [#allocation4], %s2979
      %s2982 = sshll.u32 [#allocation10], 4
      %s2983 = int_to_ptr.vmem [resolvable:$true] %s2982
      %2985 = dma.vmem_to_hbm [thread:$0]  %s2983, 32, %s7, [#allocation4]
    $region49: #{tpu_custom_call.1} parent=1 // pred_fallthru
      _
    // Predicated region
    $region50: #{tpu_custom_call.1} parent=1 // pred_check
      _
    $region51: #{tpu_custom_call.1} parent=1 // pred_check_branch
      %2987 = sbr.rel (0) target = $region53
    $region52: #{tpu_custom_call.1} parent=1 // pred_region
      %2988 = dma.done [#allocation4], 32
    $region53: #{tpu_custom_call.1} parent=1 // pred_fallthru
      _
    %2989 = vsyncpa [#allocation3], 1
    %2990 = vsyncpa [#allocation6], 1
    %2991 = vsyncpa [#allocation9], 1
    %2992 = vsyncpa [#allocation4], 1

</llo_original>
